<compile_context>
chip_gen: v7x
topology: tpu7x:2x2x1
jax: 0.10.0
libtpu: 0.0.40
codegen_flags: <defaults>
</compile_context>

<pallas_src>
import functools

import jax
import jax.numpy as jnp
from jax import lax
from jax.experimental import pallas as pl
from jax.experimental.pallas import tpu as pltpu


def _vmem_capacity_bytes():
    try:
        return int(pltpu.get_tpu_info().vmem_capacity_bytes)
    except Exception:  # conservative fallback if the query is unavailable
        return 64 * 1024 * 1024


# ---------------------------------------------------------------------------
# Kernel 1: OmniShift eval-mode depthwise 5x5 conv (reparameterized weight).
# ---------------------------------------------------------------------------
def _omnishift_kernel(x_ref, w5_ref, o_ref, xpad_ref, *, H, W, STRIP):
    """x: (1,H,W,C)  w5: (25,C)  o: (1,H,W,C) bf16  xpad: (H+4,W+4,C) f32."""
    C = x_ref.shape[-1]

    # Zero only the 2-wide halo strips (not the whole scratch).  Re-done every
    # step so results stay correct when the batch axis is sharded across
    # TensorCores (each core has its own scratch instance).
    xpad_ref[pl.ds(0, 2), :, :] = jnp.zeros((2, W + 4, C), jnp.float32)
    xpad_ref[pl.ds(H + 2, 2), :, :] = jnp.zeros((2, W + 4, C), jnp.float32)
    xpad_ref[:, pl.ds(0, 2), :] = jnp.zeros((H + 4, 2, C), jnp.float32)
    xpad_ref[:, pl.ds(W + 2, 2), :] = jnp.zeros((H + 4, 2, C), jnp.float32)

    # Interior copy (fully overwritten every grid step).
    xpad_ref[pl.ds(2, H), pl.ds(2, W), :] = x_ref[0].astype(jnp.float32)

    w5 = w5_ref[...]                                      # (25, C), loaded once

    def strip_body(s, carry):
        r = pl.multiple_of(s * STRIP, STRIP)              # output row offset
        acc = jnp.zeros((STRIP, W, C), jnp.float32)
        for dx in range(5):
            # One sublane-shifted slice per dx, confined to the strip.
            col = xpad_ref[pl.ds(r, STRIP + 4), pl.ds(dx, W), :]
            for dy in range(5):
                w = w5[dy * 5 + dx, :][None, None, :]     # (1, 1, C)
                acc = acc + col[dy:dy + STRIP, :, :] * w  # leading-axis slice
        o_ref[0, pl.ds(r, STRIP), :, :] = acc.astype(o_ref.dtype)
        return carry

    lax.fori_loop(0, H // STRIP, strip_body, 0)


def _pick_strip(H, W, C):
    """Largest divisor of H (<=16 rows) whose f32 strip stays ~<=64 KiB."""
    for s in (16, 8, 4, 2, 1):
        if H % s == 0 and s * W * C * 4 <= 64 * 1024:
            return s
    return 1


def omnishift_conv(x_nhwc, w5_flat):
    """x_nhwc: (B,H,W,C) f32; w5_flat: (25,C) f32.  Returns (B,H,W,C) bf16."""
    B, H, W, C = x_nhwc.shape
    STRIP = _pick_strip(H, W, C)

    est = (2 * H * W * C * 4            # x block (f32), double buffered
           + 2 * H * W * C * 2          # out block (bf16), double buffered
           + (H + 4) * (W + 4) * C * 4  # padded scratch
           + 2 * 25 * C * 4)            # weights
    cap = _vmem_capacity_bytes()
    vmem_limit = int(min(cap * 0.9, max(32 * 1024 * 1024, est * 3 // 2)))

    kernel = functools.partial(_omnishift_kernel, H=H, W=W, STRIP=STRIP)
    return pl.pallas_call(
        kernel,
        out_shape=jax.ShapeDtypeStruct((B, H, W, C), jnp.bfloat16),
        grid_spec=pltpu.PrefetchScalarGridSpec(
            num_scalar_prefetch=0,
            grid=(B,),
            in_specs=[
                pl.BlockSpec((1, H, W, C), lambda b: (b, 0, 0, 0)),
                pl.BlockSpec((25, C), lambda b: (0, 0)),
            ],
            out_specs=pl.BlockSpec((1, H, W, C), lambda b: (b, 0, 0, 0)),
            scratch_shapes=[pltpu.VMEM((H + 4, W + 4, C), jnp.float32)],
        ),
        compiler_params=pltpu.CompilerParams(
            dimension_semantics=("parallel",),
            vmem_limit_bytes=vmem_limit),
    )(x_nhwc, w5_flat)


# ---------------------------------------------------------------------------
# Kernel 2: channel mix (token-tiled, hidden-dim reduction, bf16 MXU).
# ---------------------------------------------------------------------------
def _cmix_kernel(xs_ref, wk_ref, wr_ref, wv_ref, o_ref, acc_ref):
    """xs: (1,TN,C) bf16; wk: (C,TH); wr: (C,C); wv: (TH,C); o: (1,TN,C)."""
    h = pl.program_id(2)
    x = xs_ref[0]                                         # (TN, C) bf16

    @pl.when(h == 0)
    def _():
        acc_ref[...] = jnp.zeros_like(acc_ref)

    k = jnp.dot(x, wk_ref[...], preferred_element_type=jnp.float32)  # (TN, TH)
    # relu -> cast -> square: epilogue runs on packed bf16 vregs.
    k = jnp.maximum(k, 0.0).astype(jnp.bfloat16)
    k = k * k
    acc_ref[...] += jnp.dot(k, wv_ref[...], preferred_element_type=jnp.float32)

    @pl.when(h == pl.num_programs(2) - 1)
    def _():
        # Receptance on the last reduction step: overlaps the accumulator
        # finalize + output DMA instead of lengthening the first step.
        r = jax.nn.sigmoid(
            jnp.dot(x, wr_ref[...], preferred_element_type=jnp.float32))
        o_ref[0] = (r * acc_ref[...]).astype(o_ref.dtype)


def _select_cmix_tiles(N, C, Hsz, xs_isz, w_isz, out_isz, budget):
    def usage(tn, th):
        return (2 * tn * C * xs_isz        # x_s tile (double buffered)
                + 2 * C * th * w_isz       # wk
                + 2 * th * C * w_isz       # wv
                + 2 * C * C * w_isz        # wr
                + 2 * tn * C * out_isz     # output tile
                + tn * C * 4)              # f32 accumulator scratch

    # Prefer fully resident weights (TH == Hsz -> constant wk/wv block index,
    # fetched once for the whole grid), then the largest token tile that fits.
    th_candidates = [Hsz] + [t for t in (2048, 1024, 512, 256, 128)
                             if t < Hsz and Hsz % t == 0]
    tn_candidates = [t for t in (2048, 1024, 512, 256, 128, 64, 32, 16, 8)
                     if t <= N] or [N]

    for th in th_candidates:
        for tn in tn_candidates:
            if usage(tn, th) <= budget:
                return tn, th, usage(tn, th)
    tn, th = tn_candidates[-1], th_candidates[-1]
    return tn, th, usage(tn, th)


def channel_mix(x_s, wk, wr, wv, out_dtype):
    """x_s: (B,N,C) bf16; wk: (C,Hsz); wr: (C,C); wv: (Hsz,C) (bf16)."""
    B, N, C = x_s.shape
    Hsz = wk.shape[1]

    cap = _vmem_capacity_bytes()
    budget = int(cap * 0.55)
    TN, TH, est = _select_cmix_tiles(
        N, C, Hsz, x_s.dtype.itemsize, wk.dtype.itemsize,
        jnp.dtype(out_dtype).itemsize, budget)
    vmem_limit = int(min(cap * 0.9, max(32 * 1024 * 1024, est * 3 // 2)))

    # Pad the token axis if it does not divide the tile (tail sliced off
    # below) instead of silently blowing up the block size.
    Np = ((N + TN - 1) // TN) * TN
    if Np != N:
        x_s = jnp.pad(x_s, ((0, 0), (0, Np - N), (0, 0)))

    grid = (B, Np // TN, Hsz // TH)
    out = pl.pallas_call(
        _cmix_kernel,
        out_shape=jax.ShapeDtypeStruct((B, Np, C), out_dtype),
        grid_spec=pltpu.PrefetchScalarGridSpec(
            num_scalar_prefetch=0,
            grid=grid,
            in_specs=[
                pl.BlockSpec((1, TN, C), lambda b, n, h: (b, n, 0)),
                pl.BlockSpec((C, TH), lambda b, n, h: (0, h)),
                pl.BlockSpec((C, C), lambda b, n, h: (0, 0)),
                pl.BlockSpec((TH, C), lambda b, n, h: (h, 0)),
            ],
            out_specs=pl.BlockSpec((1, TN, C), lambda b, n, h: (b, n, 0)),
            scratch_shapes=[pltpu.VMEM((TN, C), jnp.float32)],  # kv accumulator
        ),
        compiler_params=pltpu.CompilerParams(
            dimension_semantics=("parallel", "parallel", "arbitrary"),
            vmem_limit_bytes=vmem_limit),
    )(x_s, wk, wr, wv)
    return out[:, :N, :] if Np != N else out


def prepare_weights(w5_flat, wk, wr, wv):
    """One-time weight preparation (bf16 MXU operands); not redone per call."""
    return (w5_flat.astype(jnp.float32),
            wk.astype(jnp.bfloat16),
            wr.astype(jnp.bfloat16),
            wv.astype(jnp.bfloat16))


def vrwkv_channelmix(x, w5_flat, wk, wr, wv, resolution):
    """x: (B, N, C) float32, N = H*W.  Weights already prepared (bf16)."""
    H, W = resolution
    B, N, C = x.shape
    assert N == H * W
    x_nhwc = x.reshape(B, H, W, C)
    x_s = omnishift_conv(x_nhwc, w5_flat)                 # (B, H, W, C) bf16
    x_s = x_s.reshape(B, N, C)                            # free view in HBM
    return channel_mix(x_s, wk, wr, wv, x.dtype)


# ---------------------------------------------------------------------------
# Parameter construction + pure-JAX f32 reference.
# ---------------------------------------------------------------------------
def make_params(key, n_embd, hidden_rate=4):
    """Deterministic params mirroring VRWKV_ChannelMix.__init__ shapes."""
    C = n_embd
    hidden = int(hidden_rate * n_embd)
    ks = jax.random.split(key, 7)
    alpha = jax.random.normal(ks[0], (4,), jnp.float32)
    w1x1 = jax.random.normal(ks[1], (C, 1, 1, 1), jnp.float32) * 0.1
    w3x3 = jax.random.normal(ks[2], (C, 1, 3, 3), jnp.float32) * 0.1
    w5x5 = jax.random.normal(ks[3], (C, 1, 5, 5), jnp.float32) * 0.1
    key_w = jax.random.normal(ks[4], (hidden, C), jnp.float32) * 0.1    # Linear(C, hidden)
    recep_w = jax.random.normal(ks[5], (C, C), jnp.float32) * 0.1       # Linear(C, C)
    value_w = jax.random.normal(ks[6], (C, hidden), jnp.float32) * 0.1  # Linear(hidden, C)

    # OmniShift reparam_5x5(): combined depthwise 5x5 weight (eval path).
    identity = jnp.pad(jnp.ones((C, 1, 1, 1), jnp.float32),
                       ((0, 0), (0, 0), (2, 2), (2, 2)))
    p1x1 = jnp.pad(w1x1, ((0, 0), (0, 0), (2, 2), (2, 2)))
    p3x3 = jnp.pad(w3x3, ((0, 0), (0, 0), (1, 1), (1, 1)))
    combined = (alpha[0] * identity + alpha[1] * p1x1
                + alpha[2] * p3x3 + alpha[3] * w5x5)          # (C,1,5,5)
    w5_flat = combined[:, 0].reshape(C, 25).T                 # (25, C)

    # Transpose linear weights so kernels do x @ W (== x @ W_torch.T).
    return w5_flat, key_w.T, recep_w.T, value_w.T


def reference(x, w5_flat, wk, wr, wv, resolution):
    H, W = resolution
    B, N, C = x.shape
    xs = x.reshape(B, H, W, C)
    xpad = jnp.pad(xs, ((0, 0), (2, 2), (2, 2), (0, 0)))
    out = jnp.zeros((B, H, W, C), jnp.float32)
    for dy in range(5):
        for dx in range(5):
            out = out + xpad[:, dy:dy + H, dx:dx + W, :] * \
                w5_flat[dy * 5 + dx][None, None, None, :]
    xs = out.reshape(B, N, C)
    k = jnp.square(jnp.maximum(xs @ wk, 0.0))
    kv = k @ wv
    r = jax.nn.sigmoid(xs @ wr)
    return r * kv


def _run_case(key, B, H, W, n_embd, hidden_rate):
    N = H * W
    kx, kp = jax.random.split(key)
    x = jax.random.normal(kx, (B, N, n_embd), jnp.float32)
    w5_flat, wk, wr, wv = make_params(kp, n_embd, hidden_rate)
    # Pre-cast matmul weights to bf16 once, outside the forward path.
    w5_p, wk_p, wr_p, wv_p = prepare_weights(w5_flat, wk, wr, wv)

    out = vrwkv_channelmix(x, w5_p, wk_p, wr_p, wv_p, (H, W))
    out = jax.block_until_ready(out)
    ref = reference(x, w5_flat, wk, wr, wv, (H, W))

    assert out.shape == (B, N, n_embd)
    rel = float(jnp.max(jnp.abs(out - ref)) / (jnp.max(jnp.abs(ref)) + 1e-6))
    assert rel < 3e-2, f"mismatch vs reference: rel_err={rel}"


if __name__ == "__main__":
    key = jax.random.PRNGKey(0)
    k1, k2 = jax.random.split(key)

    # Small module-consistent shape: B=2, C=4, 16x16 tokens, hidden=16.
    _run_case(k1, B=2, H=16, W=16, n_embd=4, hidden_rate=4)

    # Larger, alignment-exercising shape: C=128, N=1024, hidden=512
    # (exercises 128-lane-dense stores, (8,128) tiling, resident-weight path).
    _run_case(k2, B=1, H=32, W=32, n_embd=128, hidden_rate=4)

    print("KERNEL_OK")
</pallas_src>

<mosaic_0001>
module attributes {stable_mosaic.version = 11 : i64} {
  func.func @_omnishift_kernel(%arg0: i32, %arg1: memref<1x16x16x4xf32, #tpu.memory_space<vmem>>, %arg2: memref<25x4xf32, #tpu.memory_space<vmem>>, %arg3: memref<1x16x16x4xbf16, #tpu.memory_space<vmem>>, %arg4: memref<20x20x4xf32, #tpu.memory_space<vmem>>) attributes {dimension_semantics = [#tpu.dimension_semantics<parallel>], iteration_bounds = array<i64: 2>, scalar_prefetch = 0 : i64, scratch_operands = 1 : i64, tpu.core_type = #tpu.core_type<tc>, window_params = [{transform_indices = @transform_0, window_bounds = array<i64: 1, 16, 16, 4>}, {pipeline_mode = #tpu.pipeline_mode<synchronous>, transform_indices = @transform_1, window_bounds = array<i64: 25, 4>}, {transform_indices = @transform_2, window_bounds = array<i64: 1, 16, 16, 4>}]} {
    %cst = arith.constant 0.000000e+00 : f32
    %0 = vector.broadcast %cst : f32 to vector<2x20x4xf32>
    %c0 = arith.constant 0 : index
    %c0_0 = arith.constant 0 : index
    %c0_1 = arith.constant 0 : index
    %1 = vector.load %arg4[%c0, %c0_0, %c0_1] : memref<20x20x4xf32, #tpu.memory_space<vmem>>, vector<2x20x4xf32>
    tpu.vector_store %arg4[%c0, %c0_0, %c0_1], %0 {strides = array<i32>} : memref<20x20x4xf32, #tpu.memory_space<vmem>>, vector<2x20x4xf32>,
    %cst_2 = arith.constant 0.000000e+00 : f32
    %2 = vector.broadcast %cst_2 : f32 to vector<2x20x4xf32>
    %c18 = arith.constant 18 : index
    %c0_3 = arith.constant 0 : index
    %c0_4 = arith.constant 0 : index
    %3 = vector.load %arg4[%c18, %c0_3, %c0_4] : memref<20x20x4xf32, #tpu.memory_space<vmem>>, vector<2x20x4xf32>
    tpu.vector_store %arg4[%c18, %c0_3, %c0_4], %2 {strides = array<i32>} : memref<20x20x4xf32, #tpu.memory_space<vmem>>, vector<2x20x4xf32>,
    %cst_5 = arith.constant 0.000000e+00 : f32
    %4 = vector.broadcast %cst_5 : f32 to vector<20x2x4xf32>
    %c0_6 = arith.constant 0 : index
    %c0_7 = arith.constant 0 : index
    %c0_8 = arith.constant 0 : index
    %5 = vector.load %arg4[%c0_6, %c0_7, %c0_8] : memref<20x20x4xf32, #tpu.memory_space<vmem>>, vector<20x2x4xf32>
    tpu.vector_store %arg4[%c0_6, %c0_7, %c0_8], %4 {strides = array<i32>} : memref<20x20x4xf32, #tpu.memory_space<vmem>>, vector<20x2x4xf32>,
    %cst_9 = arith.constant 0.000000e+00 : f32
    %6 = vector.broadcast %cst_9 : f32 to vector<20x2x4xf32>
    %c0_10 = arith.constant 0 : index
    %c18_11 = arith.constant 18 : index
    %c0_12 = arith.constant 0 : index
    %7 = vector.load %arg4[%c0_10, %c18_11, %c0_12] : memref<20x20x4xf32, #tpu.memory_space<vmem>>, vector<20x2x4xf32>
    tpu.vector_store %arg4[%c0_10, %c18_11, %c0_12], %6 {strides = array<i32>} : memref<20x20x4xf32, #tpu.memory_space<vmem>>, vector<20x2x4xf32>,
    %c0_13 = arith.constant 0 : index
    %c0_14 = arith.constant 0 : index
    %c0_15 = arith.constant 0 : index
    %c0_16 = arith.constant 0 : index
    %8 = vector.load %arg1[%c0_13, %c0_14, %c0_15, %c0_16] : memref<1x16x16x4xf32, #tpu.memory_space<vmem>>, vector<1x16x16x4xf32>
    %9 = vector.shape_cast %8 : vector<1x16x16x4xf32> to vector<16x16x4xf32>
    %c2 = arith.constant 2 : index
    %c2_17 = arith.constant 2 : index
    %c0_18 = arith.constant 0 : index
    %10 = vector.load %arg4[%c2, %c2_17, %c0_18] : memref<20x20x4xf32, #tpu.memory_space<vmem>>, vector<16x16x4xf32>
    tpu.vector_store %arg4[%c2, %c2_17, %c0_18], %9 {strides = array<i32>} : memref<20x20x4xf32, #tpu.memory_space<vmem>>, vector<16x16x4xf32>,
    %c0_19 = arith.constant 0 : index
    %c0_20 = arith.constant 0 : index
    %11 = vector.load %arg2[%c0_19, %c0_20] : memref<25x4xf32, #tpu.memory_space<vmem>>, vector<25x4xf32>
    %c0_i32 = arith.constant 0 : i32
    %c16_i32 = arith.constant 16 : i32
    %12 = arith.muli %c0_i32, %c16_i32 : i32
    %13 = tpu.assume_multiple %12, 16 : i32
    %cst_21 = arith.constant 0.000000e+00 : f32
    %14 = vector.broadcast %cst_21 : f32 to vector<16x16x4xf32>
    %15 = arith.index_cast %13 : i32 to index
    %c0_22 = arith.constant 0 : index
    %c0_23 = arith.constant 0 : index
    %16 = vector.load %arg4[%15, %c0_22, %c0_23] : memref<20x20x4xf32, #tpu.memory_space<vmem>>, vector<20x16x4xf32>
    %17 = vector.extract_strided_slice %11 {offsets = [0, 0], sizes = [1, 4], strides = [1, 1]} : vector<25x4xf32> to vector<1x4xf32>
    %18 = vector.shape_cast %17 : vector<1x4xf32> to vector<4xf32>
    %19 = vector.shape_cast %18 : vector<4xf32> to vector<1x1x4xf32>
    %20 = vector.extract_strided_slice %16 {offsets = [0, 0, 0], sizes = [16, 16, 4], strides = [1, 1, 1]} : vector<20x16x4xf32> to vector<16x16x4xf32>
    %21 = vector.broadcast %19 : vector<1x1x4xf32> to vector<16x16x4xf32>
    %22 = arith.mulf %20, %21 : vector<16x16x4xf32>
    %23 = arith.addf %14, %22 : vector<16x16x4xf32>
    %24 = vector.extract_strided_slice %11 {offsets = [5, 0], sizes = [1, 4], strides = [1, 1]} : vector<25x4xf32> to vector<1x4xf32>
    %25 = vector.shape_cast %24 : vector<1x4xf32> to vector<4xf32>
    %26 = vector.shape_cast %25 : vector<4xf32> to vector<1x1x4xf32>
    %27 = vector.extract_strided_slice %16 {offsets = [1, 0, 0], sizes = [16, 16, 4], strides = [1, 1, 1]} : vector<20x16x4xf32> to vector<16x16x4xf32>
    %28 = vector.broadcast %26 : vector<1x1x4xf32> to vector<16x16x4xf32>
    %29 = arith.mulf %27, %28 : vector<16x16x4xf32>
    %30 = arith.addf %23, %29 : vector<16x16x4xf32>
    %31 = vector.extract_strided_slice %11 {offsets = [10, 0], sizes = [1, 4], strides = [1, 1]} : vector<25x4xf32> to vector<1x4xf32>
    %32 = vector.shape_cast %31 : vector<1x4xf32> to vector<4xf32>
    %33 = vector.shape_cast %32 : vector<4xf32> to vector<1x1x4xf32>
    %34 = vector.extract_strided_slice %16 {offsets = [2, 0, 0], sizes = [16, 16, 4], strides = [1, 1, 1]} : vector<20x16x4xf32> to vector<16x16x4xf32>
    %35 = vector.broadcast %33 : vector<1x1x4xf32> to vector<16x16x4xf32>
    %36 = arith.mulf %34, %35 : vector<16x16x4xf32>
    %37 = arith.addf %30, %36 : vector<16x16x4xf32>
    %38 = vector.extract_strided_slice %11 {offsets = [15, 0], sizes = [1, 4], strides = [1, 1]} : vector<25x4xf32> to vector<1x4xf32>
    %39 = vector.shape_cast %38 : vector<1x4xf32> to vector<4xf32>
    %40 = vector.shape_cast %39 : vector<4xf32> to vector<1x1x4xf32>
    %41 = vector.extract_strided_slice %16 {offsets = [3, 0, 0], sizes = [16, 16, 4], strides = [1, 1, 1]} : vector<20x16x4xf32> to vector<16x16x4xf32>
    %42 = vector.broadcast %40 : vector<1x1x4xf32> to vector<16x16x4xf32>
    %43 = arith.mulf %41, %42 : vector<16x16x4xf32>
    %44 = arith.addf %37, %43 : vector<16x16x4xf32>
    %45 = vector.extract_strided_slice %11 {offsets = [20, 0], sizes = [1, 4], strides = [1, 1]} : vector<25x4xf32> to vector<1x4xf32>
    %46 = vector.shape_cast %45 : vector<1x4xf32> to vector<4xf32>
    %47 = vector.shape_cast %46 : vector<4xf32> to vector<1x1x4xf32>
    %48 = vector.extract_strided_slice %16 {offsets = [4, 0, 0], sizes = [16, 16, 4], strides = [1, 1, 1]} : vector<20x16x4xf32> to vector<16x16x4xf32>
    %49 = vector.broadcast %47 : vector<1x1x4xf32> to vector<16x16x4xf32>
    %50 = arith.mulf %48, %49 : vector<16x16x4xf32>
    %51 = arith.addf %44, %50 : vector<16x16x4xf32>
    %52 = arith.index_cast %13 : i32 to index
    %c1 = arith.constant 1 : index
    %c0_24 = arith.constant 0 : index
    %53 = vector.load %arg4[%52, %c1, %c0_24] : memref<20x20x4xf32, #tpu.memory_space<vmem>>, vector<20x16x4xf32>
    %54 = vector.extract_strided_slice %11 {offsets = [1, 0], sizes = [1, 4], strides = [1, 1]} : vector<25x4xf32> to vector<1x4xf32>
    %55 = vector.shape_cast %54 : vector<1x4xf32> to vector<4xf32>
    %56 = vector.shape_cast %55 : vector<4xf32> to vector<1x1x4xf32>
    %57 = vector.extract_strided_slice %53 {offsets = [0, 0, 0], sizes = [16, 16, 4], strides = [1, 1, 1]} : vector<20x16x4xf32> to vector<16x16x4xf32>
    %58 = vector.broadcast %56 : vector<1x1x4xf32> to vector<16x16x4xf32>
    %59 = arith.mulf %57, %58 : vector<16x16x4xf32>
    %60 = arith.addf %51, %59 : vector<16x16x4xf32>
    %61 = vector.extract_strided_slice %11 {offsets = [6, 0], sizes = [1, 4], strides = [1, 1]} : vector<25x4xf32> to vector<1x4xf32>
    %62 = vector.shape_cast %61 : vector<1x4xf32> to vector<4xf32>
    %63 = vector.shape_cast %62 : vector<4xf32> to vector<1x1x4xf32>
    %64 = vector.extract_strided_slice %53 {offsets = [1, 0, 0], sizes = [16, 16, 4], strides = [1, 1, 1]} : vector<20x16x4xf32> to vector<16x16x4xf32>
    %65 = vector.broadcast %63 : vector<1x1x4xf32> to vector<16x16x4xf32>
    %66 = arith.mulf %64, %65 : vector<16x16x4xf32>
    %67 = arith.addf %60, %66 : vector<16x16x4xf32>
    %68 = vector.extract_strided_slice %11 {offsets = [11, 0], sizes = [1, 4], strides = [1, 1]} : vector<25x4xf32> to vector<1x4xf32>
    %69 = vector.shape_cast %68 : vector<1x4xf32> to vector<4xf32>
    %70 = vector.shape_cast %69 : vector<4xf32> to vector<1x1x4xf32>
    %71 = vector.extract_strided_slice %53 {offsets = [2, 0, 0], sizes = [16, 16, 4], strides = [1, 1, 1]} : vector<20x16x4xf32> to vector<16x16x4xf32>
    %72 = vector.broadcast %70 : vector<1x1x4xf32> to vector<16x16x4xf32>
    %73 = arith.mulf %71, %72 : vector<16x16x4xf32>
    %74 = arith.addf %67, %73 : vector<16x16x4xf32>
    %75 = vector.extract_strided_slice %11 {offsets = [16, 0], sizes = [1, 4], strides = [1, 1]} : vector<25x4xf32> to vector<1x4xf32>
    %76 = vector.shape_cast %75 : vector<1x4xf32> to vector<4xf32>
    %77 = vector.shape_cast %76 : vector<4xf32> to vector<1x1x4xf32>
    %78 = vector.extract_strided_slice %53 {offsets = [3, 0, 0], sizes = [16, 16, 4], strides = [1, 1, 1]} : vector<20x16x4xf32> to vector<16x16x4xf32>
    %79 = vector.broadcast %77 : vector<1x1x4xf32> to vector<16x16x4xf32>
    %80 = arith.mulf %78, %79 : vector<16x16x4xf32>
    %81 = arith.addf %74, %80 : vector<16x16x4xf32>
    %82 = vector.extract_strided_slice %11 {offsets = [21, 0], sizes = [1, 4], strides = [1, 1]} : vector<25x4xf32> to vector<1x4xf32>
    %83 = vector.shape_cast %82 : vector<1x4xf32> to vector<4xf32>
    %84 = vector.shape_cast %83 : vector<4xf32> to vector<1x1x4xf32>
    %85 = vector.extract_strided_slice %53 {offsets = [4, 0, 0], sizes = [16, 16, 4], strides = [1, 1, 1]} : vector<20x16x4xf32> to vector<16x16x4xf32>
    %86 = vector.broadcast %84 : vector<1x1x4xf32> to vector<16x16x4xf32>
    %87 = arith.mulf %85, %86 : vector<16x16x4xf32>
    %88 = arith.addf %81, %87 : vector<16x16x4xf32>
    %89 = arith.index_cast %13 : i32 to index
    %c2_25 = arith.constant 2 : index
    %c0_26 = arith.constant 0 : index
    %90 = vector.load %arg4[%89, %c2_25, %c0_26] : memref<20x20x4xf32, #tpu.memory_space<vmem>>, vector<20x16x4xf32>
    %91 = vector.extract_strided_slice %11 {offsets = [2, 0], sizes = [1, 4], strides = [1, 1]} : vector<25x4xf32> to vector<1x4xf32>
    %92 = vector.shape_cast %91 : vector<1x4xf32> to vector<4xf32>
    %93 = vector.shape_cast %92 : vector<4xf32> to vector<1x1x4xf32>
    %94 = vector.extract_strided_slice %90 {offsets = [0, 0, 0], sizes = [16, 16, 4], strides = [1, 1, 1]} : vector<20x16x4xf32> to vector<16x16x4xf32>
    %95 = vector.broadcast %93 : vector<1x1x4xf32> to vector<16x16x4xf32>
    %96 = arith.mulf %94, %95 : vector<16x16x4xf32>
    %97 = arith.addf %88, %96 : vector<16x16x4xf32>
    %98 = vector.extract_strided_slice %11 {offsets = [7, 0], sizes = [1, 4], strides = [1, 1]} : vector<25x4xf32> to vector<1x4xf32>
    %99 = vector.shape_cast %98 : vector<1x4xf32> to vector<4xf32>
    %100 = vector.shape_cast %99 : vector<4xf32> to vector<1x1x4xf32>
    %101 = vector.extract_strided_slice %90 {offsets = [1, 0, 0], sizes = [16, 16, 4], strides = [1, 1, 1]} : vector<20x16x4xf32> to vector<16x16x4xf32>
    %102 = vector.broadcast %100 : vector<1x1x4xf32> to vector<16x16x4xf32>
    %103 = arith.mulf %101, %102 : vector<16x16x4xf32>
    %104 = arith.addf %97, %103 : vector<16x16x4xf32>
    %105 = vector.extract_strided_slice %11 {offsets = [12, 0], sizes = [1, 4], strides = [1, 1]} : vector<25x4xf32> to vector<1x4xf32>
    %106 = vector.shape_cast %105 : vector<1x4xf32> to vector<4xf32>
    %107 = vector.shape_cast %106 : vector<4xf32> to vector<1x1x4xf32>
    %108 = vector.extract_strided_slice %90 {offsets = [2, 0, 0], sizes = [16, 16, 4], strides = [1, 1, 1]} : vector<20x16x4xf32> to vector<16x16x4xf32>
    %109 = vector.broadcast %107 : vector<1x1x4xf32> to vector<16x16x4xf32>
    %110 = arith.mulf %108, %109 : vector<16x16x4xf32>
    %111 = arith.addf %104, %110 : vector<16x16x4xf32>
    %112 = vector.extract_strided_slice %11 {offsets = [17, 0], sizes = [1, 4], strides = [1, 1]} : vector<25x4xf32> to vector<1x4xf32>
    %113 = vector.shape_cast %112 : vector<1x4xf32> to vector<4xf32>
    %114 = vector.shape_cast %113 : vector<4xf32> to vector<1x1x4xf32>
    %115 = vector.extract_strided_slice %90 {offsets = [3, 0, 0], sizes = [16, 16, 4], strides = [1, 1, 1]} : vector<20x16x4xf32> to vector<16x16x4xf32>
    %116 = vector.broadcast %114 : vector<1x1x4xf32> to vector<16x16x4xf32>
    %117 = arith.mulf %115, %116 : vector<16x16x4xf32>
    %118 = arith.addf %111, %117 : vector<16x16x4xf32>
    %119 = vector.extract_strided_slice %11 {offsets = [22, 0], sizes = [1, 4], strides = [1, 1]} : vector<25x4xf32> to vector<1x4xf32>
    %120 = vector.shape_cast %119 : vector<1x4xf32> to vector<4xf32>
    %121 = vector.shape_cast %120 : vector<4xf32> to vector<1x1x4xf32>
    %122 = vector.extract_strided_slice %90 {offsets = [4, 0, 0], sizes = [16, 16, 4], strides = [1, 1, 1]} : vector<20x16x4xf32> to vector<16x16x4xf32>
    %123 = vector.broadcast %121 : vector<1x1x4xf32> to vector<16x16x4xf32>
    %124 = arith.mulf %122, %123 : vector<16x16x4xf32>
    %125 = arith.addf %118, %124 : vector<16x16x4xf32>
    %126 = arith.index_cast %13 : i32 to index
    %c3 = arith.constant 3 : index
    %c0_27 = arith.constant 0 : index
    %127 = vector.load %arg4[%126, %c3, %c0_27] : memref<20x20x4xf32, #tpu.memory_space<vmem>>, vector<20x16x4xf32>
    %128 = vector.extract_strided_slice %11 {offsets = [3, 0], sizes = [1, 4], strides = [1, 1]} : vector<25x4xf32> to vector<1x4xf32>
    %129 = vector.shape_cast %128 : vector<1x4xf32> to vector<4xf32>
    %130 = vector.shape_cast %129 : vector<4xf32> to vector<1x1x4xf32>
    %131 = vector.extract_strided_slice %127 {offsets = [0, 0, 0], sizes = [16, 16, 4], strides = [1, 1, 1]} : vector<20x16x4xf32> to vector<16x16x4xf32>
    %132 = vector.broadcast %130 : vector<1x1x4xf32> to vector<16x16x4xf32>
    %133 = arith.mulf %131, %132 : vector<16x16x4xf32>
    %134 = arith.addf %125, %133 : vector<16x16x4xf32>
    %135 = vector.extract_strided_slice %11 {offsets = [8, 0], sizes = [1, 4], strides = [1, 1]} : vector<25x4xf32> to vector<1x4xf32>
    %136 = vector.shape_cast %135 : vector<1x4xf32> to vector<4xf32>
    %137 = vector.shape_cast %136 : vector<4xf32> to vector<1x1x4xf32>
    %138 = vector.extract_strided_slice %127 {offsets = [1, 0, 0], sizes = [16, 16, 4], strides = [1, 1, 1]} : vector<20x16x4xf32> to vector<16x16x4xf32>
    %139 = vector.broadcast %137 : vector<1x1x4xf32> to vector<16x16x4xf32>
    %140 = arith.mulf %138, %139 : vector<16x16x4xf32>
    %141 = arith.addf %134, %140 : vector<16x16x4xf32>
    %142 = vector.extract_strided_slice %11 {offsets = [13, 0], sizes = [1, 4], strides = [1, 1]} : vector<25x4xf32> to vector<1x4xf32>
    %143 = vector.shape_cast %142 : vector<1x4xf32> to vector<4xf32>
    %144 = vector.shape_cast %143 : vector<4xf32> to vector<1x1x4xf32>
    %145 = vector.extract_strided_slice %127 {offsets = [2, 0, 0], sizes = [16, 16, 4], strides = [1, 1, 1]} : vector<20x16x4xf32> to vector<16x16x4xf32>
    %146 = vector.broadcast %144 : vector<1x1x4xf32> to vector<16x16x4xf32>
    %147 = arith.mulf %145, %146 : vector<16x16x4xf32>
    %148 = arith.addf %141, %147 : vector<16x16x4xf32>
    %149 = vector.extract_strided_slice %11 {offsets = [18, 0], sizes = [1, 4], strides = [1, 1]} : vector<25x4xf32> to vector<1x4xf32>
    %150 = vector.shape_cast %149 : vector<1x4xf32> to vector<4xf32>
    %151 = vector.shape_cast %150 : vector<4xf32> to vector<1x1x4xf32>
    %152 = vector.extract_strided_slice %127 {offsets = [3, 0, 0], sizes = [16, 16, 4], strides = [1, 1, 1]} : vector<20x16x4xf32> to vector<16x16x4xf32>
    %153 = vector.broadcast %151 : vector<1x1x4xf32> to vector<16x16x4xf32>
    %154 = arith.mulf %152, %153 : vector<16x16x4xf32>
    %155 = arith.addf %148, %154 : vector<16x16x4xf32>
    %156 = vector.extract_strided_slice %11 {offsets = [23, 0], sizes = [1, 4], strides = [1, 1]} : vector<25x4xf32> to vector<1x4xf32>
    %157 = vector.shape_cast %156 : vector<1x4xf32> to vector<4xf32>
    %158 = vector.shape_cast %157 : vector<4xf32> to vector<1x1x4xf32>
    %159 = vector.extract_strided_slice %127 {offsets = [4, 0, 0], sizes = [16, 16, 4], strides = [1, 1, 1]} : vector<20x16x4xf32> to vector<16x16x4xf32>
    %160 = vector.broadcast %158 : vector<1x1x4xf32> to vector<16x16x4xf32>
    %161 = arith.mulf %159, %160 : vector<16x16x4xf32>
    %162 = arith.addf %155, %161 : vector<16x16x4xf32>
    %163 = arith.index_cast %13 : i32 to index
    %c4 = arith.constant 4 : index
    %c0_28 = arith.constant 0 : index
    %164 = vector.load %arg4[%163, %c4, %c0_28] : memref<20x20x4xf32, #tpu.memory_space<vmem>>, vector<20x16x4xf32>
    %165 = vector.extract_strided_slice %11 {offsets = [4, 0], sizes = [1, 4], strides = [1, 1]} : vector<25x4xf32> to vector<1x4xf32>
    %166 = vector.shape_cast %165 : vector<1x4xf32> to vector<4xf32>
    %167 = vector.shape_cast %166 : vector<4xf32> to vector<1x1x4xf32>
    %168 = vector.extract_strided_slice %164 {offsets = [0, 0, 0], sizes = [16, 16, 4], strides = [1, 1, 1]} : vector<20x16x4xf32> to vector<16x16x4xf32>
    %169 = vector.broadcast %167 : vector<1x1x4xf32> to vector<16x16x4xf32>
    %170 = arith.mulf %168, %169 : vector<16x16x4xf32>
    %171 = arith.addf %162, %170 : vector<16x16x4xf32>
    %172 = vector.extract_strided_slice %11 {offsets = [9, 0], sizes = [1, 4], strides = [1, 1]} : vector<25x4xf32> to vector<1x4xf32>
    %173 = vector.shape_cast %172 : vector<1x4xf32> to vector<4xf32>
    %174 = vector.shape_cast %173 : vector<4xf32> to vector<1x1x4xf32>
    %175 = vector.extract_strided_slice %164 {offsets = [1, 0, 0], sizes = [16, 16, 4], strides = [1, 1, 1]} : vector<20x16x4xf32> to vector<16x16x4xf32>
    %176 = vector.broadcast %174 : vector<1x1x4xf32> to vector<16x16x4xf32>
    %177 = arith.mulf %175, %176 : vector<16x16x4xf32>
    %178 = arith.addf %171, %177 : vector<16x16x4xf32>
    %179 = vector.extract_strided_slice %11 {offsets = [14, 0], sizes = [1, 4], strides = [1, 1]} : vector<25x4xf32> to vector<1x4xf32>
    %180 = vector.shape_cast %179 : vector<1x4xf32> to vector<4xf32>
    %181 = vector.shape_cast %180 : vector<4xf32> to vector<1x1x4xf32>
    %182 = vector.extract_strided_slice %164 {offsets = [2, 0, 0], sizes = [16, 16, 4], strides = [1, 1, 1]} : vector<20x16x4xf32> to vector<16x16x4xf32>
    %183 = vector.broadcast %181 : vector<1x1x4xf32> to vector<16x16x4xf32>
    %184 = arith.mulf %182, %183 : vector<16x16x4xf32>
    %185 = arith.addf %178, %184 : vector<16x16x4xf32>
    %186 = vector.extract_strided_slice %11 {offsets = [19, 0], sizes = [1, 4], strides = [1, 1]} : vector<25x4xf32> to vector<1x4xf32>
    %187 = vector.shape_cast %186 : vector<1x4xf32> to vector<4xf32>
    %188 = vector.shape_cast %187 : vector<4xf32> to vector<1x1x4xf32>
    %189 = vector.extract_strided_slice %164 {offsets = [3, 0, 0], sizes = [16, 16, 4], strides = [1, 1, 1]} : vector<20x16x4xf32> to vector<16x16x4xf32>
    %190 = vector.broadcast %188 : vector<1x1x4xf32> to vector<16x16x4xf32>
    %191 = arith.mulf %189, %190 : vector<16x16x4xf32>
    %192 = arith.addf %185, %191 : vector<16x16x4xf32>
    %193 = vector.extract_strided_slice %11 {offsets = [24, 0], sizes = [1, 4], strides = [1, 1]} : vector<25x4xf32> to vector<1x4xf32>
    %194 = vector.shape_cast %193 : vector<1x4xf32> to vector<4xf32>
    %195 = vector.shape_cast %194 : vector<4xf32> to vector<1x1x4xf32>
    %196 = vector.extract_strided_slice %164 {offsets = [4, 0, 0], sizes = [16, 16, 4], strides = [1, 1, 1]} : vector<20x16x4xf32> to vector<16x16x4xf32>
    %197 = vector.broadcast %195 : vector<1x1x4xf32> to vector<16x16x4xf32>
    %198 = arith.mulf %196, %197 : vector<16x16x4xf32>
    %199 = arith.addf %192, %198 : vector<16x16x4xf32>
    %200 = arith.truncf %199 : vector<16x16x4xf32> to vector<16x16x4xbf16>
    %c0_29 = arith.constant 0 : index
    %201 = arith.index_cast %13 : i32 to index
    %c0_30 = arith.constant 0 : index
    %c0_31 = arith.constant 0 : index
    %202 = vector.load %arg3[%c0_29, %201, %c0_30, %c0_31] : memref<1x16x16x4xbf16, #tpu.memory_space<vmem>>, vector<1x16x16x4xbf16>
    %203 = vector.shape_cast %202 : vector<1x16x16x4xbf16> to vector<16x16x4xbf16>
    %204 = vector.shape_cast %200 : vector<16x16x4xbf16> to vector<1x16x16x4xbf16>
    tpu.vector_store %arg3[%c0_29, %201, %c0_30, %c0_31], %204 {strides = array<i32>} : memref<1x16x16x4xbf16, #tpu.memory_space<vmem>>, vector<1x16x16x4xbf16>,
    %c1_i32 = arith.constant 1 : i32
    return
  }
  func.func @transform_0(%arg0: i32) -> (i32, i32, i32, i32) {
    %c0_i32 = arith.constant 0 : i32
    %c0_i32_0 = arith.constant 0 : i32
    %c0_i32_1 = arith.constant 0 : i32
    %c0_i32_2 = arith.constant 0 : i32
    return %arg0, %c0_i32, %c0_i32_0, %c0_i32_1 : i32, i32, i32, i32
  }
  func.func @transform_1(%arg0: i32) -> (i32, i32) {
    %c0_i32 = arith.constant 0 : i32
    %c0_i32_0 = arith.constant 0 : i32
    %c0_i32_1 = arith.constant 0 : i32
    return %c0_i32, %c0_i32_0 : i32, i32
  }
  func.func @transform_2(%arg0: i32) -> (i32, i32, i32, i32) {
    %c0_i32 = arith.constant 0 : i32
    %c0_i32_0 = arith.constant 0 : i32
    %c0_i32_1 = arith.constant 0 : i32
    %c0_i32_2 = arith.constant 0 : i32
    return %arg0, %c0_i32, %c0_i32_0, %c0_i32_1 : i32, i32, i32, i32
  }
}

</mosaic_0001>

<llo_original>
// kernel: tpu_custom_call.1
$region0: #{tpu_custom_call.1}
  #allocation0 [shape = 'u32[]', space=smem, size = 0x4, offset = 0x4, fixed_abs, tag = 'smem constant byte address 0x4 - core index']
  #allocation1 [shape = 'u32[144,128]{1,0:T(1,128)}', space=vmem, size = 0x12000, scoped, tag = 'internal scratch']
  #allocation2 [shape = 'f32[20,20,4]{2,1,0:T(8,128)}', space=vmem, size = 0x3c000, scoped, tag = 'scratch operand']
  %s0 = inlined_call_operand.vmem [shape: f32[2,16,16,4], index: 0, kind: input, shape index: {}]
  %s1 = inlined_call_operand.vmem [shape: f32[25,4], index: 1, kind: input, shape index: {}]
  %s2 = inlined_call_operand.vmem [shape: bf16[2,16,16,4], index: 2, kind: output, shape index: {}]
  %s3 = sld [smem:[#allocation0]]
  $region41: #{tpu_custom_call.1} parent=0
    _
  %s5 = ssub.s32 1, %s3
  %s6 = scalar_select 0, %s5, %s3
  loop: start=0, step=1, limit=4
  $region2: #{tpu_custom_call.1} parent=0 // loop_pre_header
    _
  $region3: #{tpu_custom_call.1} parent=0 // loop_header
    %s8 = sphi 0, %s12
    %p9 = scmp.ge.s32.totalorder %s8, 4
    %s18 = sphi 0, %s20
    %s21 = sphi 0, %s18
    %s22 = sphi 0, %s21
    %s38 = sphi 0, %s22
    %s42 = sphi 0, %s42
    %s44 = sphi 0, %s42
    %s45 = sphi 0, %s44
    %s59 = sphi 0, %s45
    %s65 = sphi 0, %s67
    %s68 = sphi 0, %s65
    %s69 = sphi 0, %s68
    %s85 = sphi 0, %s69
  $region4: #{tpu_custom_call.1} parent=0 // loop_header_branch
    %11 = sbr.rel (%p9) target = $region8
  $region5: #{tpu_custom_call.1} parent=0 // loop_body
    %s13 = ssub.s32 %s8, 1
    %s14 = ssub.s32 %s8, 2
    %s15 = sadd.s32 %s8, 1
    %s16 = ssub.s32 %s8, %s15
    %p17 = scmp.eq.s32.totalorder %s16, 0
    %s19 = sadd.s32 %s18, 1
    %s20 = scalar_select %p17, %s18, %s19
    %p23 = pneg %p17
    %p24 = scmp.eq.s32.totalorder %s8, 1
    %p25 = por %p23, %p24
    %p26 = scmp.ne.s32.totalorder %s18, %s21
    %p27 = scmp.eq.s32.totalorder %s8, 0
    %p28 = por %p26, %p27
    %p29 = scmp.ne.s32.totalorder %s18, %s21
    %p30 = scmp.eq.s32.totalorder %s13, 1
    %p31 = por %p29, %p30
    %p32 = scmp.ne.s32.totalorder %s21, %s22
    %p33 = scmp.eq.s32.totalorder %s13, 0
    %p34 = por %p32, %p33
    %p35 = scmp.ne.s32.totalorder %s21, %s22
    %p36 = scmp.eq.s32.totalorder %s14, 1
    %p37 = por %p35, %p36
    %p39 = scmp.ne.s32.totalorder %s22, %s38
    %p40 = scmp.eq.s32.totalorder %s14, 0
    %p41 = por %p39, %p40
    %s43 = sadd.s32 %s42, 1
    %p46 = scmp.eq.s32.totalorder %s8, 1
    %p47 = scmp.ne.s32.totalorder %s42, %s44
    %p48 = scmp.eq.s32.totalorder %s8, 0
    %p49 = por %p47, %p48
    %p50 = scmp.ne.s32.totalorder %s42, %s44
    %p51 = scmp.eq.s32.totalorder %s13, 1
    %p52 = por %p50, %p51
    %p53 = scmp.ne.s32.totalorder %s44, %s45
    %p54 = scmp.eq.s32.totalorder %s13, 0
    %p55 = por %p53, %p54
    %p56 = scmp.ne.s32.totalorder %s44, %s45
    %p57 = scmp.eq.s32.totalorder %s14, 1
    %p58 = por %p56, %p57
    %p60 = scmp.ne.s32.totalorder %s45, %s59
    %p61 = scmp.eq.s32.totalorder %s14, 0
    %p62 = por %p60, %p61
    %s63 = ssub.s32 %s8, %s15
    %p64 = scmp.eq.s32.totalorder %s63, 0
    %s66 = sadd.s32 %s65, 1
    %s67 = scalar_select %p64, %s65, %s66
    %p70 = pneg %p64
    %p71 = scmp.eq.s32.totalorder %s8, 1
    %p72 = por %p70, %p71
    %p73 = scmp.ne.s32.totalorder %s65, %s68
    %p74 = scmp.eq.s32.totalorder %s8, 0
    %p75 = por %p73, %p74
    %p76 = scmp.ne.s32.totalorder %s65, %s68
    %p77 = scmp.eq.s32.totalorder %s13, 1
    %p78 = por %p76, %p77
    %p79 = scmp.ne.s32.totalorder %s68, %s69
    %p80 = scmp.eq.s32.totalorder %s13, 0
    %p81 = por %p79, %p80
    %p82 = scmp.ne.s32.totalorder %s68, %s69
    %p83 = scmp.eq.s32.totalorder %s14, 1
    %p84 = por %p82, %p83
    %p86 = scmp.ne.s32.totalorder %s69, %s85
    %p87 = scmp.eq.s32.totalorder %s14, 0
    %p88 = por %p86, %p87
    %p89 = scmp.le.s32.totalorder 1, %s8
    %p90 = scmp.lt.s32.totalorder %s8, 3
    %p91 = pnand %p89, %p90
    %p92 = pneg %p91
    // Predicated region
    $region9: #{tpu_custom_call.1} parent=5 // pred_check
      _
    $region10: #{tpu_custom_call.1} parent=5 // pred_check_branch
      %94 = sbr.rel (%p91) target = $region12
    $region11: #{tpu_custom_call.1} parent=5 // pred_region
      %s95 = ssub.s32 %s8, 1
      // Predicated region
      $region13: #{tpu_custom_call.1} parent=11 // pred_check
        %p96 = pneg %p55
      $region14: #{tpu_custom_call.1} parent=11 // pred_check_branch
        %98 = sbr.rel (%p96) target = $region16
      $region15: #{tpu_custom_call.1} parent=11 // pred_region
        _
      $region16: #{tpu_custom_call.1} parent=11 // pred_fallthru
        _
    $region12: #{tpu_custom_call.1} parent=5 // pred_fallthru
      _
    %p99 = scmp.lt.s32.totalorder %s8, 2
    // Predicated region
    $region17: #{tpu_custom_call.1} parent=5 // pred_check
      %p100 = pneg %p99
    $region18: #{tpu_custom_call.1} parent=5 // pred_check_branch
      %102 = sbr.rel (%p100) target = $region20
    $region19: #{tpu_custom_call.1} parent=5 // pred_region
      // Predicated region
      $region21: #{tpu_custom_call.1} parent=19 // pred_check
        %p103 = pneg %p28
      $region22: #{tpu_custom_call.1} parent=19 // pred_check_branch
        %105 = sbr.rel (%p103) target = $region24
      $region23: #{tpu_custom_call.1} parent=19 // pred_region
        %p106 = scmp.lt.s32.totalorder %s8, 1
        %s107 = scalar_select %p106, %s8, 1
        %s108 = smul.addr %s107, 32
        %s109 = smul.addr %s108, 8
        %s110 = scalar_lea.vmem %s0, %s109
      $region24: #{tpu_custom_call.1} parent=19 // pred_fallthru
        _
    $region20: #{tpu_custom_call.1} parent=5 // pred_fallthru
      _
    %p111 = scmp.le.s32.totalorder 1, %s8
    %p112 = scmp.lt.s32.totalorder %s8, 3
    %p113 = pnand %p111, %p112
    %p114 = pneg %p113
    // Predicated region
    $region25: #{tpu_custom_call.1} parent=5 // pred_check
      _
    $region26: #{tpu_custom_call.1} parent=5 // pred_check_branch
      %116 = sbr.rel (%p113) target = $region28
    $region27: #{tpu_custom_call.1} parent=5 // pred_region
      %s117 = ssub.s32 %s8, 1
      %p118 = scmp.lt.s32.totalorder %s13, 1
      %s119 = scalar_select %p118, %s13, 1
      %s120 = smul.addr %s119, 32
      %s121 = smul.addr %s120, 8
      %s122 = scalar_lea.vmem %s0, %s121
      %p123 = pneg %p34
      %p124 = pneg %p31
      %p125 = pneg %p55
      %p126 = pneg %p52
      %p127 = pneg %p81
      %p128 = pneg %p78
      %p129 = scmp.lt.s32.totalorder %s13, 1
      %s130 = scalar_select %p129, %s13, 1
      %s131 = smul.addr %s130, 32
      %s132 = smul.addr %s131, 4
      %s133 = scalar_lea.vmem %s2, %s132
      %p134 = scmp.lt.s32.totalorder %s13, 1
      %s135 = scalar_select %p134, %s13, 1
      %s136 = smul.addr %s135, 32
      %s137 = smul.addr %s136, 8
      %s138 = scalar_lea.vmem %s0, %s137
      %p139 = scmp.lt.s32.totalorder %s13, 1
      %s140 = scalar_select %p139, %s13, 1
      %s141 = smul.addr %s140, 32
      %s142 = smul.addr %s141, 4
      %s143 = scalar_lea.vmem %s2, %s142
      %vm144 = vcmask 31744
      %145 = vst.msk [vmem:[#allocation2] sm:$0xff] %vm144, 0.0
      %146 = vst.msk [vmem:[#allocation2 + $0x8] sm:$0xff] %vm144, 0.0
      %vm147 = vcmask 27648
      %148 = vst.msk [vmem:[#allocation2 + $0x10] sm:$0xf] %vm147, 0.0
      %149 = vst.msk [vmem:[#allocation2 + $0x18] sm:$0xff] %vm144, 0.0
      %150 = vst.msk [vmem:[#allocation2 + $0x20] sm:$0xff] %vm144, 0.0
      %151 = vst.msk [vmem:[#allocation2 + $0x28] sm:$0xf] %vm147, 0.0
      %s152 = scalar_lea.vmem [#allocation2], 432
      %153 = vst.msk [vmem:[%s152] sm:$0xff] %vm144, 0.0
      %154 = vst.msk [vmem:[%s152 + $0x8] sm:$0xff] %vm144, 0.0
      %155 = vst.msk [vmem:[%s152 + $0x10] sm:$0xf] %vm147, 0.0
      %156 = vst.msk [vmem:[%s152 + $0x18] sm:$0xff] %vm144, 0.0
      %157 = vst.msk [vmem:[%s152 + $0x20] sm:$0xff] %vm144, 0.0
      %158 = vst.msk [vmem:[%s152 + $0x28] sm:$0xf] %vm147, 0.0
      %vm159 = vcmask 25600
      %160 = vst.msk [vmem:[#allocation2] sm:$0x3] %vm159, 0.0
      %161 = vst.msk [vmem:[#allocation2 + $0x18] sm:$0x3] %vm159, 0.0
      %162 = vst.msk [vmem:[#allocation2 + $0x30] sm:$0x3] %vm159, 0.0
      %163 = vst.msk [vmem:[#allocation2 + $0x48] sm:$0x3] %vm159, 0.0
      %164 = vst.msk [vmem:[#allocation2 + $0x60] sm:$0x3] %vm159, 0.0
      %165 = vst.msk [vmem:[#allocation2 + $0x78] sm:$0x3] %vm159, 0.0
      %166 = vst.msk [vmem:[#allocation2 + $0x90] sm:$0x3] %vm159, 0.0
      %167 = vst.msk [vmem:[#allocation2 + $0xa8] sm:$0x3] %vm159, 0.0
      %168 = vst.msk [vmem:[#allocation2 + $0xc0] sm:$0x3] %vm159, 0.0
      %169 = vst.msk [vmem:[#allocation2 + $0xd8] sm:$0x3] %vm159, 0.0
      %170 = vst.msk [vmem:[#allocation2 + $0xf0] sm:$0x3] %vm159, 0.0
      %171 = vst.msk [vmem:[#allocation2 + $0x108] sm:$0x3] %vm159, 0.0
      %172 = vst.msk [vmem:[#allocation2 + $0x120] sm:$0x3] %vm159, 0.0
      %173 = vst.msk [vmem:[#allocation2 + $0x138] sm:$0x3] %vm159, 0.0
      %174 = vst.msk [vmem:[#allocation2 + $0x150] sm:$0x3] %vm159, 0.0
      %175 = vst.msk [vmem:[#allocation2 + $0x168] sm:$0x3] %vm159, 0.0
      %176 = vst.msk [vmem:[#allocation2 + $0x180] sm:$0x3] %vm159, 0.0
      %177 = vst.msk [vmem:[#allocation2 + $0x198] sm:$0x3] %vm159, 0.0
      %178 = vst.msk [vmem:[#allocation2 + $0x1b0] sm:$0x3] %vm159, 0.0
      %179 = vst.msk [vmem:[#allocation2 + $0x1c8] sm:$0x3] %vm159, 0.0
      %180 = vst.msk [vmem:[#allocation2 + $0x12] sm:$0x3] %vm159, 0.0
      %181 = vst.msk [vmem:[#allocation2 + $0x2a] sm:$0x3] %vm159, 0.0
      %182 = vst.msk [vmem:[#allocation2 + $0x42] sm:$0x3] %vm159, 0.0
      %183 = vst.msk [vmem:[#allocation2 + $0x5a] sm:$0x3] %vm159, 0.0
      %184 = vst.msk [vmem:[#allocation2 + $0x72] sm:$0x3] %vm159, 0.0
      %185 = vst.msk [vmem:[#allocation2 + $0x8a] sm:$0x3] %vm159, 0.0
      %186 = vst.msk [vmem:[#allocation2 + $0xa2] sm:$0x3] %vm159, 0.0
      %187 = vst.msk [vmem:[#allocation2 + $0xba] sm:$0x3] %vm159, 0.0
      %188 = vst.msk [vmem:[#allocation2 + $0xd2] sm:$0x3] %vm159, 0.0
      %189 = vst.msk [vmem:[#allocation2 + $0xea] sm:$0x3] %vm159, 0.0
      %190 = vst.msk [vmem:[#allocation2 + $0x102] sm:$0x3] %vm159, 0.0
      %191 = vst.msk [vmem:[#allocation2 + $0x11a] sm:$0x3] %vm159, 0.0
      %192 = vst.msk [vmem:[#allocation2 + $0x132] sm:$0x3] %vm159, 0.0
      %193 = vst.msk [vmem:[#allocation2 + $0x14a] sm:$0x3] %vm159, 0.0
      %194 = vst.msk [vmem:[#allocation2 + $0x162] sm:$0x3] %vm159, 0.0
      %195 = vst.msk [vmem:[#allocation2 + $0x17a] sm:$0x3] %vm159, 0.0
      %196 = vst.msk [vmem:[#allocation2 + $0x192] sm:$0x3] %vm159, 0.0
      %197 = vst.msk [vmem:[#allocation2 + $0x1aa] sm:$0x3] %vm159, 0.0
      %198 = vst.msk [vmem:[#allocation2 + $0x1c2] sm:$0x3] %vm159, 0.0
      %199 = vst.msk [vmem:[#allocation2 + $0x1da] sm:$0x3] %vm159, 0.0
      %v200 = vld [vmem:[%s138] sm:$0xff]
      %v201 = vld [vmem:[%s138 + $0x8] sm:$0xff]
      %v202 = vld [vmem:[%s138 + $0x10] sm:$0xff]
      %v203 = vld [vmem:[%s138 + $0x18] sm:$0xff]
      %v204 = vld [vmem:[%s138 + $0x20] sm:$0xff]
      %v205 = vld [vmem:[%s138 + $0x28] sm:$0xff]
      %v206 = vld [vmem:[%s138 + $0x30] sm:$0xff]
      %v207 = vld [vmem:[%s138 + $0x38] sm:$0xff]
      %v208 = vld [vmem:[%s138 + $0x40] sm:$0xff]
      %v209 = vld [vmem:[%s138 + $0x48] sm:$0xff]
      %v210 = vld [vmem:[%s138 + $0x50] sm:$0xff]
      %v211 = vld [vmem:[%s138 + $0x58] sm:$0xff]
      %v212 = vld [vmem:[%s138 + $0x60] sm:$0xff]
      %v213 = vld [vmem:[%s138 + $0x68] sm:$0xff]
      %v214 = vld [vmem:[%s138 + $0x70] sm:$0xff]
      %v215 = vld [vmem:[%s138 + $0x78] sm:$0xff]
      %v216 = vld [vmem:[%s138 + $0x80] sm:$0xff]
      %v217 = vld [vmem:[%s138 + $0x88] sm:$0xff]
      %v218 = vld [vmem:[%s138 + $0x90] sm:$0xff]
      %v219 = vld [vmem:[%s138 + $0x98] sm:$0xff]
      %v220 = vld [vmem:[%s138 + $0xa0] sm:$0xff]
      %v221 = vld [vmem:[%s138 + $0xa8] sm:$0xff]
      %v222 = vld [vmem:[%s138 + $0xb0] sm:$0xff]
      %v223 = vld [vmem:[%s138 + $0xb8] sm:$0xff]
      %v224 = vld [vmem:[%s138 + $0xc0] sm:$0xff]
      %v225 = vld [vmem:[%s138 + $0xc8] sm:$0xff]
      %v226 = vld [vmem:[%s138 + $0xd0] sm:$0xff]
      %v227 = vld [vmem:[%s138 + $0xd8] sm:$0xff]
      %v228 = vld [vmem:[%s138 + $0xe0] sm:$0xff]
      %v229 = vld [vmem:[%s138 + $0xe8] sm:$0xff]
      %v230 = vld [vmem:[%s138 + $0xf0] sm:$0xff]
      %v231 = vld [vmem:[%s138 + $0xf8] sm:$0xff]
      %s232 = scalar_lea.vmem [#allocation2], 48
      %233 = vst.msk [vmem:[%s232 + $0x2] sm:$0xff] %vm144, %v200
      %234 = vst.msk [vmem:[%s232 + $0xa] sm:$0xff] %vm144, %v201
      %235 = vst.msk [vmem:[%s232 + $0x1a] sm:$0xff] %vm144, %v202
      %236 = vst.msk [vmem:[%s232 + $0x22] sm:$0xff] %vm144, %v203
      %237 = vst.msk [vmem:[%s232 + $0x32] sm:$0xff] %vm144, %v204
      %238 = vst.msk [vmem:[%s232 + $0x3a] sm:$0xff] %vm144, %v205
      %239 = vst.msk [vmem:[%s232 + $0x4a] sm:$0xff] %vm144, %v206
      %240 = vst.msk [vmem:[%s232 + $0x52] sm:$0xff] %vm144, %v207
      %241 = vst.msk [vmem:[%s232 + $0x62] sm:$0xff] %vm144, %v208
      %242 = vst.msk [vmem:[%s232 + $0x6a] sm:$0xff] %vm144, %v209
      %243 = vst.msk [vmem:[%s232 + $0x7a] sm:$0xff] %vm144, %v210
      %244 = vst.msk [vmem:[%s232 + $0x82] sm:$0xff] %vm144, %v211
      %245 = vst.msk [vmem:[%s232 + $0x92] sm:$0xff] %vm144, %v212
      %246 = vst.msk [vmem:[%s232 + $0x9a] sm:$0xff] %vm144, %v213
      %247 = vst.msk [vmem:[%s232 + $0xaa] sm:$0xff] %vm144, %v214
      %248 = vst.msk [vmem:[%s232 + $0xb2] sm:$0xff] %vm144, %v215
      %249 = vst.msk [vmem:[%s232 + $0xc2] sm:$0xff] %vm144, %v216
      %250 = vst.msk [vmem:[%s232 + $0xca] sm:$0xff] %vm144, %v217
      %251 = vst.msk [vmem:[%s232 + $0xda] sm:$0xff] %vm144, %v218
      %252 = vst.msk [vmem:[%s232 + $0xe2] sm:$0xff] %vm144, %v219
      %253 = vst.msk [vmem:[%s232 + $0xf2] sm:$0xff] %vm144, %v220
      %254 = vst.msk [vmem:[%s232 + $0xfa] sm:$0xff] %vm144, %v221
      %255 = vst.msk [vmem:[%s232 + $0x10a] sm:$0xff] %vm144, %v222
      %256 = vst.msk [vmem:[%s232 + $0x112] sm:$0xff] %vm144, %v223
      %257 = vst.msk [vmem:[%s232 + $0x122] sm:$0xff] %vm144, %v224
      %258 = vst.msk [vmem:[%s232 + $0x12a] sm:$0xff] %vm144, %v225
      %259 = vst.msk [vmem:[%s232 + $0x13a] sm:$0xff] %vm144, %v226
      %260 = vst.msk [vmem:[%s232 + $0x142] sm:$0xff] %vm144, %v227
      %261 = vst.msk [vmem:[%s232 + $0x152] sm:$0xff] %vm144, %v228
      %262 = vst.msk [vmem:[%s232 + $0x15a] sm:$0xff] %vm144, %v229
      %263 = vst.msk [vmem:[%s232 + $0x16a] sm:$0xff] %vm144, %v230
      %264 = vst.msk [vmem:[%s232 + $0x172] sm:$0xff] %vm144, %v231
      %v265 = vld [vmem:[%s1] sm:$0xff]
      %v266 = vld [vmem:[%s1 + $0x8] sm:$0xff]
      %v267 = vld [vmem:[%s1 + $0x10] sm:$0xff]
      %v268 = vld [vmem:[%s1 + $0x18] sm:$0x1]
      %s269 = smul.u32 0, 24
      %s270 = scalar_lea.vmem [#allocation2], %s269
      %v271 = vld [vmem:[%s270] sm:$0xff]
      %v272 = vld [vmem:[%s270 + $0x8] sm:$0xff]
      %v273 = vld [vmem:[%s270 + $0x18] sm:$0xff]
      %v274 = vld [vmem:[%s270 + $0x20] sm:$0xff]
      %v275 = vld [vmem:[%s270 + $0x30] sm:$0xff]
      %v276 = vld [vmem:[%s270 + $0x38] sm:$0xff]
      %v277 = vld [vmem:[%s270 + $0x48] sm:$0xff]
      %v278 = vld [vmem:[%s270 + $0x50] sm:$0xff]
      %v279 = vld [vmem:[%s270 + $0x60] sm:$0xff]
      %v280 = vld [vmem:[%s270 + $0x68] sm:$0xff]
      %v281 = vld [vmem:[%s270 + $0x78] sm:$0xff]
      %v282 = vld [vmem:[%s270 + $0x80] sm:$0xff]
      %v283 = vld [vmem:[%s270 + $0x90] sm:$0xff]
      %v284 = vld [vmem:[%s270 + $0x98] sm:$0xff]
      %v285 = vld [vmem:[%s270 + $0xa8] sm:$0xff]
      %v286 = vld [vmem:[%s270 + $0xb0] sm:$0xff]
      %v287 = vld [vmem:[%s270 + $0xc0] sm:$0xff]
      %v288 = vld [vmem:[%s270 + $0xc8] sm:$0xff]
      %v289 = vld [vmem:[%s270 + $0xd8] sm:$0xff]
      %v290 = vld [vmem:[%s270 + $0xe0] sm:$0xff]
      %v291 = vld [vmem:[%s270 + $0xf0] sm:$0xff]
      %v292 = vld [vmem:[%s270 + $0xf8] sm:$0xff]
      %v293 = vld [vmem:[%s270 + $0x108] sm:$0xff]
      %v294 = vld [vmem:[%s270 + $0x110] sm:$0xff]
      %v295 = vld [vmem:[%s270 + $0x120] sm:$0xff]
      %v296 = vld [vmem:[%s270 + $0x128] sm:$0xff]
      %v297 = vld [vmem:[%s270 + $0x138] sm:$0xff]
      %v298 = vld [vmem:[%s270 + $0x140] sm:$0xff]
      %v299 = vld [vmem:[%s270 + $0x150] sm:$0xff]
      %v300 = vld [vmem:[%s270 + $0x158] sm:$0xff]
      %v301 = vld [vmem:[%s270 + $0x168] sm:$0xff]
      %v302 = vld [vmem:[%s270 + $0x170] sm:$0xff]
      %v303 = vld [vmem:[%s270 + $0x180] sm:$0xff]
      %v304 = vld [vmem:[%s270 + $0x188] sm:$0xff]
      %v305 = vld [vmem:[%s270 + $0x198] sm:$0xff]
      %v306 = vld [vmem:[%s270 + $0x1a0] sm:$0xff]
      %v307 = vld [vmem:[%s270 + $0x1b0] sm:$0xff]
      %v308 = vld [vmem:[%s270 + $0x1b8] sm:$0xff]
      %v309 = vld [vmem:[%s270 + $0x1c8] sm:$0xff]
      %v310 = vld [vmem:[%s270 + $0x1d0] sm:$0xff]
      %v311 = vlaneseq
      %v312 = vshrl.u32 %v311, 7
      %v313 = vsub.s32 0, %v312
      %v314 = vrot.slane %v265, %v313
      %v315 = vmul.f32 %v271, %v314
      %v316 = vmul.f32 %v272, %v314
      %v317 = vmul.f32 %v273, %v314
      %v318 = vmul.f32 %v274, %v314
      %v319 = vmul.f32 %v275, %v314
      %v320 = vmul.f32 %v276, %v314
      %v321 = vmul.f32 %v277, %v314
      %v322 = vmul.f32 %v278, %v314
      %v323 = vmul.f32 %v279, %v314
      %v324 = vmul.f32 %v280, %v314
      %v325 = vmul.f32 %v281, %v314
      %v326 = vmul.f32 %v282, %v314
      %v327 = vmul.f32 %v283, %v314
      %v328 = vmul.f32 %v284, %v314
      %v329 = vmul.f32 %v285, %v314
      %v330 = vmul.f32 %v286, %v314
      %v331 = vmul.f32 %v287, %v314
      %v332 = vmul.f32 %v288, %v314
      %v333 = vmul.f32 %v289, %v314
      %v334 = vmul.f32 %v290, %v314
      %v335 = vmul.f32 %v291, %v314
      %v336 = vmul.f32 %v292, %v314
      %v337 = vmul.f32 %v293, %v314
      %v338 = vmul.f32 %v294, %v314
      %v339 = vmul.f32 %v295, %v314
      %v340 = vmul.f32 %v296, %v314
      %v341 = vmul.f32 %v297, %v314
      %v342 = vmul.f32 %v298, %v314
      %v343 = vmul.f32 %v299, %v314
      %v344 = vmul.f32 %v300, %v314
      %v345 = vmul.f32 %v301, %v314
      %v346 = vmul.f32 %v302, %v314
      %v347 = vadd.f32 %v315, 0.0
      %v348 = vadd.f32 %v316, 0.0
      %v349 = vadd.f32 %v317, 0.0
      %v350 = vadd.f32 %v318, 0.0
      %v351 = vadd.f32 %v319, 0.0
      %v352 = vadd.f32 %v320, 0.0
      %v353 = vadd.f32 %v321, 0.0
      %v354 = vadd.f32 %v322, 0.0
      %v355 = vadd.f32 %v323, 0.0
      %v356 = vadd.f32 %v324, 0.0
      %v357 = vadd.f32 %v325, 0.0
      %v358 = vadd.f32 %v326, 0.0
      %v359 = vadd.f32 %v327, 0.0
      %v360 = vadd.f32 %v328, 0.0
      %v361 = vadd.f32 %v329, 0.0
      %v362 = vadd.f32 %v330, 0.0
      %v363 = vadd.f32 %v331, 0.0
      %v364 = vadd.f32 %v332, 0.0
      %v365 = vadd.f32 %v333, 0.0
      %v366 = vadd.f32 %v334, 0.0
      %v367 = vadd.f32 %v335, 0.0
      %v368 = vadd.f32 %v336, 0.0
      %v369 = vadd.f32 %v337, 0.0
      %v370 = vadd.f32 %v338, 0.0
      %v371 = vadd.f32 %v339, 0.0
      %v372 = vadd.f32 %v340, 0.0
      %v373 = vadd.f32 %v341, 0.0
      %v374 = vadd.f32 %v342, 0.0
      %v375 = vadd.f32 %v343, 0.0
      %v376 = vadd.f32 %v344, 0.0
      %v377 = vadd.f32 %v345, 0.0
      %v378 = vadd.f32 %v346, 0.0
      %v379 = vlaneseq
      %v380 = vshrl.u32 %v379, 7
      %v381 = vsub.s32 5, %v380
      %v382 = vrot.slane %v265, %v381
      %v383 = vmul.f32 %v273, %v382
      %v384 = vmul.f32 %v274, %v382
      %v385 = vmul.f32 %v275, %v382
      %v386 = vmul.f32 %v276, %v382
      %v387 = vmul.f32 %v277, %v382
      %v388 = vmul.f32 %v278, %v382
      %v389 = vmul.f32 %v279, %v382
      %v390 = vmul.f32 %v280, %v382
      %v391 = vmul.f32 %v281, %v382
      %v392 = vmul.f32 %v282, %v382
      %v393 = vmul.f32 %v283, %v382
      %v394 = vmul.f32 %v284, %v382
      %v395 = vmul.f32 %v285, %v382
      %v396 = vmul.f32 %v286, %v382
      %v397 = vmul.f32 %v287, %v382
      %v398 = vmul.f32 %v288, %v382
      %v399 = vmul.f32 %v289, %v382
      %v400 = vmul.f32 %v290, %v382
      %v401 = vmul.f32 %v291, %v382
      %v402 = vmul.f32 %v292, %v382
      %v403 = vmul.f32 %v293, %v382
      %v404 = vmul.f32 %v294, %v382
      %v405 = vmul.f32 %v295, %v382
      %v406 = vmul.f32 %v296, %v382
      %v407 = vmul.f32 %v297, %v382
      %v408 = vmul.f32 %v298, %v382
      %v409 = vmul.f32 %v299, %v382
      %v410 = vmul.f32 %v300, %v382
      %v411 = vmul.f32 %v301, %v382
      %v412 = vmul.f32 %v302, %v382
      %v413 = vmul.f32 %v303, %v382
      %v414 = vmul.f32 %v304, %v382
      %v415 = vadd.f32 %v347, %v383
      %v416 = vadd.f32 %v348, %v384
      %v417 = vadd.f32 %v349, %v385
      %v418 = vadd.f32 %v350, %v386
      %v419 = vadd.f32 %v351, %v387
      %v420 = vadd.f32 %v352, %v388
      %v421 = vadd.f32 %v353, %v389
      %v422 = vadd.f32 %v354, %v390
      %v423 = vadd.f32 %v355, %v391
      %v424 = vadd.f32 %v356, %v392
      %v425 = vadd.f32 %v357, %v393
      %v426 = vadd.f32 %v358, %v394
      %v427 = vadd.f32 %v359, %v395
      %v428 = vadd.f32 %v360, %v396
      %v429 = vadd.f32 %v361, %v397
      %v430 = vadd.f32 %v362, %v398
      %v431 = vadd.f32 %v363, %v399
      %v432 = vadd.f32 %v364, %v400
      %v433 = vadd.f32 %v365, %v401
      %v434 = vadd.f32 %v366, %v402
      %v435 = vadd.f32 %v367, %v403
      %v436 = vadd.f32 %v368, %v404
      %v437 = vadd.f32 %v369, %v405
      %v438 = vadd.f32 %v370, %v406
      %v439 = vadd.f32 %v371, %v407
      %v440 = vadd.f32 %v372, %v408
      %v441 = vadd.f32 %v373, %v409
      %v442 = vadd.f32 %v374, %v410
      %v443 = vadd.f32 %v375, %v411
      %v444 = vadd.f32 %v376, %v412
      %v445 = vadd.f32 %v377, %v413
      %v446 = vadd.f32 %v378, %v414
      %v447 = vlaneseq
      %v448 = vshrl.u32 %v447, 7
      %v449 = vsub.s32 2, %v448
      %v450 = vrot.slane %v266, %v449
      %v451 = vmul.f32 %v275, %v450
      %v452 = vmul.f32 %v276, %v450
      %v453 = vmul.f32 %v277, %v450
      %v454 = vmul.f32 %v278, %v450
      %v455 = vmul.f32 %v279, %v450
      %v456 = vmul.f32 %v280, %v450
      %v457 = vmul.f32 %v281, %v450
      %v458 = vmul.f32 %v282, %v450
      %v459 = vmul.f32 %v283, %v450
      %v460 = vmul.f32 %v284, %v450
      %v461 = vmul.f32 %v285, %v450
      %v462 = vmul.f32 %v286, %v450
      %v463 = vmul.f32 %v287, %v450
      %v464 = vmul.f32 %v288, %v450
      %v465 = vmul.f32 %v289, %v450
      %v466 = vmul.f32 %v290, %v450
      %v467 = vmul.f32 %v291, %v450
      %v468 = vmul.f32 %v292, %v450
      %v469 = vmul.f32 %v293, %v450
      %v470 = vmul.f32 %v294, %v450
      %v471 = vmul.f32 %v295, %v450
      %v472 = vmul.f32 %v296, %v450
      %v473 = vmul.f32 %v297, %v450
      %v474 = vmul.f32 %v298, %v450
      %v475 = vmul.f32 %v299, %v450
      %v476 = vmul.f32 %v300, %v450
      %v477 = vmul.f32 %v301, %v450
      %v478 = vmul.f32 %v302, %v450
      %v479 = vmul.f32 %v303, %v450
      %v480 = vmul.f32 %v304, %v450
      %v481 = vmul.f32 %v305, %v450
      %v482 = vmul.f32 %v306, %v450
      %v483 = vadd.f32 %v415, %v451
      %v484 = vadd.f32 %v416, %v452
      %v485 = vadd.f32 %v417, %v453
      %v486 = vadd.f32 %v418, %v454
      %v487 = vadd.f32 %v419, %v455
      %v488 = vadd.f32 %v420, %v456
      %v489 = vadd.f32 %v421, %v457
      %v490 = vadd.f32 %v422, %v458
      %v491 = vadd.f32 %v423, %v459
      %v492 = vadd.f32 %v424, %v460
      %v493 = vadd.f32 %v425, %v461
      %v494 = vadd.f32 %v426, %v462
      %v495 = vadd.f32 %v427, %v463
      %v496 = vadd.f32 %v428, %v464
      %v497 = vadd.f32 %v429, %v465
      %v498 = vadd.f32 %v430, %v466
      %v499 = vadd.f32 %v431, %v467
      %v500 = vadd.f32 %v432, %v468
      %v501 = vadd.f32 %v433, %v469
      %v502 = vadd.f32 %v434, %v470
      %v503 = vadd.f32 %v435, %v471
      %v504 = vadd.f32 %v436, %v472
      %v505 = vadd.f32 %v437, %v473
      %v506 = vadd.f32 %v438, %v474
      %v507 = vadd.f32 %v439, %v475
      %v508 = vadd.f32 %v440, %v476
      %v509 = vadd.f32 %v441, %v477
      %v510 = vadd.f32 %v442, %v478
      %v511 = vadd.f32 %v443, %v479
      %v512 = vadd.f32 %v444, %v480
      %v513 = vadd.f32 %v445, %v481
      %v514 = vadd.f32 %v446, %v482
      %v515 = vlaneseq
      %v516 = vshrl.u32 %v515, 7
      %v517 = vsub.s32 7, %v516
      %v518 = vrot.slane %v266, %v517
      %v519 = vmul.f32 %v277, %v518
      %v520 = vmul.f32 %v278, %v518
      %v521 = vmul.f32 %v279, %v518
      %v522 = vmul.f32 %v280, %v518
      %v523 = vmul.f32 %v281, %v518
      %v524 = vmul.f32 %v282, %v518
      %v525 = vmul.f32 %v283, %v518
      %v526 = vmul.f32 %v284, %v518
      %v527 = vmul.f32 %v285, %v518
      %v528 = vmul.f32 %v286, %v518
      %v529 = vmul.f32 %v287, %v518
      %v530 = vmul.f32 %v288, %v518
      %v531 = vmul.f32 %v289, %v518
      %v532 = vmul.f32 %v290, %v518
      %v533 = vmul.f32 %v291, %v518
      %v534 = vmul.f32 %v292, %v518
      %v535 = vmul.f32 %v293, %v518
      %v536 = vmul.f32 %v294, %v518
      %v537 = vmul.f32 %v295, %v518
      %v538 = vmul.f32 %v296, %v518
      %v539 = vmul.f32 %v297, %v518
      %v540 = vmul.f32 %v298, %v518
      %v541 = vmul.f32 %v299, %v518
      %v542 = vmul.f32 %v300, %v518
      %v543 = vmul.f32 %v301, %v518
      %v544 = vmul.f32 %v302, %v518
      %v545 = vmul.f32 %v303, %v518
      %v546 = vmul.f32 %v304, %v518
      %v547 = vmul.f32 %v305, %v518
      %v548 = vmul.f32 %v306, %v518
      %v549 = vmul.f32 %v307, %v518
      %v550 = vmul.f32 %v308, %v518
      %v551 = vadd.f32 %v483, %v519
      %v552 = vadd.f32 %v484, %v520
      %v553 = vadd.f32 %v485, %v521
      %v554 = vadd.f32 %v486, %v522
      %v555 = vadd.f32 %v487, %v523
      %v556 = vadd.f32 %v488, %v524
      %v557 = vadd.f32 %v489, %v525
      %v558 = vadd.f32 %v490, %v526
      %v559 = vadd.f32 %v491, %v527
      %v560 = vadd.f32 %v492, %v528
      %v561 = vadd.f32 %v493, %v529
      %v562 = vadd.f32 %v494, %v530
      %v563 = vadd.f32 %v495, %v531
      %v564 = vadd.f32 %v496, %v532
      %v565 = vadd.f32 %v497, %v533
      %v566 = vadd.f32 %v498, %v534
      %v567 = vadd.f32 %v499, %v535
      %v568 = vadd.f32 %v500, %v536
      %v569 = vadd.f32 %v501, %v537
      %v570 = vadd.f32 %v502, %v538
      %v571 = vadd.f32 %v503, %v539
      %v572 = vadd.f32 %v504, %v540
      %v573 = vadd.f32 %v505, %v541
      %v574 = vadd.f32 %v506, %v542
      %v575 = vadd.f32 %v507, %v543
      %v576 = vadd.f32 %v508, %v544
      %v577 = vadd.f32 %v509, %v545
      %v578 = vadd.f32 %v510, %v546
      %v579 = vadd.f32 %v511, %v547
      %v580 = vadd.f32 %v512, %v548
      %v581 = vadd.f32 %v513, %v549
      %v582 = vadd.f32 %v514, %v550
      %v583 = vlaneseq
      %v584 = vshrl.u32 %v583, 7
      %v585 = vsub.s32 4, %v584
      %v586 = vrot.slane %v267, %v585
      %v587 = vmul.f32 %v279, %v586
      %v588 = vmul.f32 %v280, %v586
      %v589 = vmul.f32 %v281, %v586
      %v590 = vmul.f32 %v282, %v586
      %v591 = vmul.f32 %v283, %v586
      %v592 = vmul.f32 %v284, %v586
      %v593 = vmul.f32 %v285, %v586
      %v594 = vmul.f32 %v286, %v586
      %v595 = vmul.f32 %v287, %v586
      %v596 = vmul.f32 %v288, %v586
      %v597 = vmul.f32 %v289, %v586
      %v598 = vmul.f32 %v290, %v586
      %v599 = vmul.f32 %v291, %v586
      %v600 = vmul.f32 %v292, %v586
      %v601 = vmul.f32 %v293, %v586
      %v602 = vmul.f32 %v294, %v586
      %v603 = vmul.f32 %v295, %v586
      %v604 = vmul.f32 %v296, %v586
      %v605 = vmul.f32 %v297, %v586
      %v606 = vmul.f32 %v298, %v586
      %v607 = vmul.f32 %v299, %v586
      %v608 = vmul.f32 %v300, %v586
      %v609 = vmul.f32 %v301, %v586
      %v610 = vmul.f32 %v302, %v586
      %v611 = vmul.f32 %v303, %v586
      %v612 = vmul.f32 %v304, %v586
      %v613 = vmul.f32 %v305, %v586
      %v614 = vmul.f32 %v306, %v586
      %v615 = vmul.f32 %v307, %v586
      %v616 = vmul.f32 %v308, %v586
      %v617 = vmul.f32 %v309, %v586
      %v618 = vmul.f32 %v310, %v586
      %v619 = vadd.f32 %v551, %v587
      %v620 = vadd.f32 %v552, %v588
      %v621 = vadd.f32 %v553, %v589
      %v622 = vadd.f32 %v554, %v590
      %v623 = vadd.f32 %v555, %v591
      %v624 = vadd.f32 %v556, %v592
      %v625 = vadd.f32 %v557, %v593
      %v626 = vadd.f32 %v558, %v594
      %v627 = vadd.f32 %v559, %v595
      %v628 = vadd.f32 %v560, %v596
      %v629 = vadd.f32 %v561, %v597
      %v630 = vadd.f32 %v562, %v598
      %v631 = vadd.f32 %v563, %v599
      %v632 = vadd.f32 %v564, %v600
      %v633 = vadd.f32 %v565, %v601
      %v634 = vadd.f32 %v566, %v602
      %v635 = vadd.f32 %v567, %v603
      %v636 = vadd.f32 %v568, %v604
      %v637 = vadd.f32 %v569, %v605
      %v638 = vadd.f32 %v570, %v606
      %v639 = vadd.f32 %v571, %v607
      %v640 = vadd.f32 %v572, %v608
      %v641 = vadd.f32 %v573, %v609
      %v642 = vadd.f32 %v574, %v610
      %v643 = vadd.f32 %v575, %v611
      %v644 = vadd.f32 %v576, %v612
      %v645 = vadd.f32 %v577, %v613
      %v646 = vadd.f32 %v578, %v614
      %v647 = vadd.f32 %v579, %v615
      %v648 = vadd.f32 %v580, %v616
      %v649 = vadd.f32 %v581, %v617
      %v650 = vadd.f32 %v582, %v618
      %v651 = vld [vmem:[%s270 + $0x1] sm:$0xff]
      %v652 = vld [vmem:[%s270 + $0x9] sm:$0xff]
      %v653 = vld [vmem:[%s270 + $0x19] sm:$0xff]
      %v654 = vld [vmem:[%s270 + $0x21] sm:$0xff]
      %v655 = vld [vmem:[%s270 + $0x31] sm:$0xff]
      %v656 = vld [vmem:[%s270 + $0x39] sm:$0xff]
      %v657 = vld [vmem:[%s270 + $0x49] sm:$0xff]
      %v658 = vld [vmem:[%s270 + $0x51] sm:$0xff]
      %v659 = vld [vmem:[%s270 + $0x61] sm:$0xff]
      %v660 = vld [vmem:[%s270 + $0x69] sm:$0xff]
      %v661 = vld [vmem:[%s270 + $0x79] sm:$0xff]
      %v662 = vld [vmem:[%s270 + $0x81] sm:$0xff]
      %v663 = vld [vmem:[%s270 + $0x91] sm:$0xff]
      %v664 = vld [vmem:[%s270 + $0x99] sm:$0xff]
      %v665 = vld [vmem:[%s270 + $0xa9] sm:$0xff]
      %v666 = vld [vmem:[%s270 + $0xb1] sm:$0xff]
      %v667 = vld [vmem:[%s270 + $0xc1] sm:$0xff]
      %v668 = vld [vmem:[%s270 + $0xc9] sm:$0xff]
      %v669 = vld [vmem:[%s270 + $0xd9] sm:$0xff]
      %v670 = vld [vmem:[%s270 + $0xe1] sm:$0xff]
      %v671 = vld [vmem:[%s270 + $0xf1] sm:$0xff]
      %v672 = vld [vmem:[%s270 + $0xf9] sm:$0xff]
      %v673 = vld [vmem:[%s270 + $0x109] sm:$0xff]
      %v674 = vld [vmem:[%s270 + $0x111] sm:$0xff]
      %v675 = vld [vmem:[%s270 + $0x121] sm:$0xff]
      %v676 = vld [vmem:[%s270 + $0x129] sm:$0xff]
      %v677 = vld [vmem:[%s270 + $0x139] sm:$0xff]
      %v678 = vld [vmem:[%s270 + $0x141] sm:$0xff]
      %v679 = vld [vmem:[%s270 + $0x151] sm:$0xff]
      %v680 = vld [vmem:[%s270 + $0x159] sm:$0xff]
      %v681 = vld [vmem:[%s270 + $0x169] sm:$0xff]
      %v682 = vld [vmem:[%s270 + $0x171] sm:$0xff]
      %v683 = vld [vmem:[%s270 + $0x181] sm:$0xff]
      %v684 = vld [vmem:[%s270 + $0x189] sm:$0xff]
      %v685 = vld [vmem:[%s270 + $0x199] sm:$0xff]
      %v686 = vld [vmem:[%s270 + $0x1a1] sm:$0xff]
      %v687 = vld [vmem:[%s270 + $0x1b1] sm:$0xff]
      %v688 = vld [vmem:[%s270 + $0x1b9] sm:$0xff]
      %v689 = vld [vmem:[%s270 + $0x1c9] sm:$0xff]
      %v690 = vld [vmem:[%s270 + $0x1d1] sm:$0xff]
      %v691 = vlaneseq
      %v692 = vshrl.u32 %v691, 7
      %v693 = vsub.s32 1, %v692
      %v694 = vrot.slane %v265, %v693
      %v695 = vmul.f32 %v651, %v694
      %v696 = vmul.f32 %v652, %v694
      %v697 = vmul.f32 %v653, %v694
      %v698 = vmul.f32 %v654, %v694
      %v699 = vmul.f32 %v655, %v694
      %v700 = vmul.f32 %v656, %v694
      %v701 = vmul.f32 %v657, %v694
      %v702 = vmul.f32 %v658, %v694
      %v703 = vmul.f32 %v659, %v694
      %v704 = vmul.f32 %v660, %v694
      %v705 = vmul.f32 %v661, %v694
      %v706 = vmul.f32 %v662, %v694
      %v707 = vmul.f32 %v663, %v694
      %v708 = vmul.f32 %v664, %v694
      %v709 = vmul.f32 %v665, %v694
      %v710 = vmul.f32 %v666, %v694
      %v711 = vmul.f32 %v667, %v694
      %v712 = vmul.f32 %v668, %v694
      %v713 = vmul.f32 %v669, %v694
      %v714 = vmul.f32 %v670, %v694
      %v715 = vmul.f32 %v671, %v694
      %v716 = vmul.f32 %v672, %v694
      %v717 = vmul.f32 %v673, %v694
      %v718 = vmul.f32 %v674, %v694
      %v719 = vmul.f32 %v675, %v694
      %v720 = vmul.f32 %v676, %v694
      %v721 = vmul.f32 %v677, %v694
      %v722 = vmul.f32 %v678, %v694
      %v723 = vmul.f32 %v679, %v694
      %v724 = vmul.f32 %v680, %v694
      %v725 = vmul.f32 %v681, %v694
      %v726 = vmul.f32 %v682, %v694
      %v727 = vadd.f32 %v619, %v695
      %v728 = vadd.f32 %v620, %v696
      %v729 = vadd.f32 %v621, %v697
      %v730 = vadd.f32 %v622, %v698
      %v731 = vadd.f32 %v623, %v699
      %v732 = vadd.f32 %v624, %v700
      %v733 = vadd.f32 %v625, %v701
      %v734 = vadd.f32 %v626, %v702
      %v735 = vadd.f32 %v627, %v703
      %v736 = vadd.f32 %v628, %v704
      %v737 = vadd.f32 %v629, %v705
      %v738 = vadd.f32 %v630, %v706
      %v739 = vadd.f32 %v631, %v707
      %v740 = vadd.f32 %v632, %v708
      %v741 = vadd.f32 %v633, %v709
      %v742 = vadd.f32 %v634, %v710
      %v743 = vadd.f32 %v635, %v711
      %v744 = vadd.f32 %v636, %v712
      %v745 = vadd.f32 %v637, %v713
      %v746 = vadd.f32 %v638, %v714
      %v747 = vadd.f32 %v639, %v715
      %v748 = vadd.f32 %v640, %v716
      %v749 = vadd.f32 %v641, %v717
      %v750 = vadd.f32 %v642, %v718
      %v751 = vadd.f32 %v643, %v719
      %v752 = vadd.f32 %v644, %v720
      %v753 = vadd.f32 %v645, %v721
      %v754 = vadd.f32 %v646, %v722
      %v755 = vadd.f32 %v647, %v723
      %v756 = vadd.f32 %v648, %v724
      %v757 = vadd.f32 %v649, %v725
      %v758 = vadd.f32 %v650, %v726
      %v759 = vlaneseq
      %v760 = vshrl.u32 %v759, 7
      %v761 = vsub.s32 6, %v760
      %v762 = vrot.slane %v265, %v761
      %v763 = vmul.f32 %v653, %v762
      %v764 = vmul.f32 %v654, %v762
      %v765 = vmul.f32 %v655, %v762
      %v766 = vmul.f32 %v656, %v762
      %v767 = vmul.f32 %v657, %v762
      %v768 = vmul.f32 %v658, %v762
      %v769 = vmul.f32 %v659, %v762
      %v770 = vmul.f32 %v660, %v762
      %v771 = vmul.f32 %v661, %v762
      %v772 = vmul.f32 %v662, %v762
      %v773 = vmul.f32 %v663, %v762
      %v774 = vmul.f32 %v664, %v762
      %v775 = vmul.f32 %v665, %v762
      %v776 = vmul.f32 %v666, %v762
      %v777 = vmul.f32 %v667, %v762
      %v778 = vmul.f32 %v668, %v762
      %v779 = vmul.f32 %v669, %v762
      %v780 = vmul.f32 %v670, %v762
      %v781 = vmul.f32 %v671, %v762
      %v782 = vmul.f32 %v672, %v762
      %v783 = vmul.f32 %v673, %v762
      %v784 = vmul.f32 %v674, %v762
      %v785 = vmul.f32 %v675, %v762
      %v786 = vmul.f32 %v676, %v762
      %v787 = vmul.f32 %v677, %v762
      %v788 = vmul.f32 %v678, %v762
      %v789 = vmul.f32 %v679, %v762
      %v790 = vmul.f32 %v680, %v762
      %v791 = vmul.f32 %v681, %v762
      %v792 = vmul.f32 %v682, %v762
      %v793 = vmul.f32 %v683, %v762
      %v794 = vmul.f32 %v684, %v762
      %v795 = vadd.f32 %v727, %v763
      %v796 = vadd.f32 %v728, %v764
      %v797 = vadd.f32 %v729, %v765
      %v798 = vadd.f32 %v730, %v766
      %v799 = vadd.f32 %v731, %v767
      %v800 = vadd.f32 %v732, %v768
      %v801 = vadd.f32 %v733, %v769
      %v802 = vadd.f32 %v734, %v770
      %v803 = vadd.f32 %v735, %v771
      %v804 = vadd.f32 %v736, %v772
      %v805 = vadd.f32 %v737, %v773
      %v806 = vadd.f32 %v738, %v774
      %v807 = vadd.f32 %v739, %v775
      %v808 = vadd.f32 %v740, %v776
      %v809 = vadd.f32 %v741, %v777
      %v810 = vadd.f32 %v742, %v778
      %v811 = vadd.f32 %v743, %v779
      %v812 = vadd.f32 %v744, %v780
      %v813 = vadd.f32 %v745, %v781
      %v814 = vadd.f32 %v746, %v782
      %v815 = vadd.f32 %v747, %v783
      %v816 = vadd.f32 %v748, %v784
      %v817 = vadd.f32 %v749, %v785
      %v818 = vadd.f32 %v750, %v786
      %v819 = vadd.f32 %v751, %v787
      %v820 = vadd.f32 %v752, %v788
      %v821 = vadd.f32 %v753, %v789
      %v822 = vadd.f32 %v754, %v790
      %v823 = vadd.f32 %v755, %v791
      %v824 = vadd.f32 %v756, %v792
      %v825 = vadd.f32 %v757, %v793
      %v826 = vadd.f32 %v758, %v794
      %v827 = vlaneseq
      %v828 = vshrl.u32 %v827, 7
      %v829 = vsub.s32 3, %v828
      %v830 = vrot.slane %v266, %v829
      %v831 = vmul.f32 %v655, %v830
      %v832 = vmul.f32 %v656, %v830
      %v833 = vmul.f32 %v657, %v830
      %v834 = vmul.f32 %v658, %v830
      %v835 = vmul.f32 %v659, %v830
      %v836 = vmul.f32 %v660, %v830
      %v837 = vmul.f32 %v661, %v830
      %v838 = vmul.f32 %v662, %v830
      %v839 = vmul.f32 %v663, %v830
      %v840 = vmul.f32 %v664, %v830
      %v841 = vmul.f32 %v665, %v830
      %v842 = vmul.f32 %v666, %v830
      %v843 = vmul.f32 %v667, %v830
      %v844 = vmul.f32 %v668, %v830
      %v845 = vmul.f32 %v669, %v830
      %v846 = vmul.f32 %v670, %v830
      %v847 = vmul.f32 %v671, %v830
      %v848 = vmul.f32 %v672, %v830
      %v849 = vmul.f32 %v673, %v830
      %v850 = vmul.f32 %v674, %v830
      %v851 = vmul.f32 %v675, %v830
      %v852 = vmul.f32 %v676, %v830
      %v853 = vmul.f32 %v677, %v830
      %v854 = vmul.f32 %v678, %v830
      %v855 = vmul.f32 %v679, %v830
      %v856 = vmul.f32 %v680, %v830
      %v857 = vmul.f32 %v681, %v830
      %v858 = vmul.f32 %v682, %v830
      %v859 = vmul.f32 %v683, %v830
      %v860 = vmul.f32 %v684, %v830
      %v861 = vmul.f32 %v685, %v830
      %v862 = vmul.f32 %v686, %v830
      %v863 = vadd.f32 %v795, %v831
      %v864 = vadd.f32 %v796, %v832
      %v865 = vadd.f32 %v797, %v833
      %v866 = vadd.f32 %v798, %v834
      %v867 = vadd.f32 %v799, %v835
      %v868 = vadd.f32 %v800, %v836
      %v869 = vadd.f32 %v801, %v837
      %v870 = vadd.f32 %v802, %v838
      %v871 = vadd.f32 %v803, %v839
      %v872 = vadd.f32 %v804, %v840
      %v873 = vadd.f32 %v805, %v841
      %v874 = vadd.f32 %v806, %v842
      %v875 = vadd.f32 %v807, %v843
      %v876 = vadd.f32 %v808, %v844
      %v877 = vadd.f32 %v809, %v845
      %v878 = vadd.f32 %v810, %v846
      %v879 = vadd.f32 %v811, %v847
      %v880 = vadd.f32 %v812, %v848
      %v881 = vadd.f32 %v813, %v849
      %v882 = vadd.f32 %v814, %v850
      %v883 = vadd.f32 %v815, %v851
      %v884 = vadd.f32 %v816, %v852
      %v885 = vadd.f32 %v817, %v853
      %v886 = vadd.f32 %v818, %v854
      %v887 = vadd.f32 %v819, %v855
      %v888 = vadd.f32 %v820, %v856
      %v889 = vadd.f32 %v821, %v857
      %v890 = vadd.f32 %v822, %v858
      %v891 = vadd.f32 %v823, %v859
      %v892 = vadd.f32 %v824, %v860
      %v893 = vadd.f32 %v825, %v861
      %v894 = vadd.f32 %v826, %v862
      %v895 = vlaneseq
      %v896 = vshrl.u32 %v895, 7
      %v897 = vsub.s32 0, %v896
      %v898 = vrot.slane %v267, %v897
      %v899 = vmul.f32 %v657, %v898
      %v900 = vmul.f32 %v658, %v898
      %v901 = vmul.f32 %v659, %v898
      %v902 = vmul.f32 %v660, %v898
      %v903 = vmul.f32 %v661, %v898
      %v904 = vmul.f32 %v662, %v898
      %v905 = vmul.f32 %v663, %v898
      %v906 = vmul.f32 %v664, %v898
      %v907 = vmul.f32 %v665, %v898
      %v908 = vmul.f32 %v666, %v898
      %v909 = vmul.f32 %v667, %v898
      %v910 = vmul.f32 %v668, %v898
      %v911 = vmul.f32 %v669, %v898
      %v912 = vmul.f32 %v670, %v898
      %v913 = vmul.f32 %v671, %v898
      %v914 = vmul.f32 %v672, %v898
      %v915 = vmul.f32 %v673, %v898
      %v916 = vmul.f32 %v674, %v898
      %v917 = vmul.f32 %v675, %v898
      %v918 = vmul.f32 %v676, %v898
      %v919 = vmul.f32 %v677, %v898
      %v920 = vmul.f32 %v678, %v898
      %v921 = vmul.f32 %v679, %v898
      %v922 = vmul.f32 %v680, %v898
      %v923 = vmul.f32 %v681, %v898
      %v924 = vmul.f32 %v682, %v898
      %v925 = vmul.f32 %v683, %v898
      %v926 = vmul.f32 %v684, %v898
      %v927 = vmul.f32 %v685, %v898
      %v928 = vmul.f32 %v686, %v898
      %v929 = vmul.f32 %v687, %v898
      %v930 = vmul.f32 %v688, %v898
      %v931 = vadd.f32 %v863, %v899
      %v932 = vadd.f32 %v864, %v900
      %v933 = vadd.f32 %v865, %v901
      %v934 = vadd.f32 %v866, %v902
      %v935 = vadd.f32 %v867, %v903
      %v936 = vadd.f32 %v868, %v904
      %v937 = vadd.f32 %v869, %v905
      %v938 = vadd.f32 %v870, %v906
      %v939 = vadd.f32 %v871, %v907
      %v940 = vadd.f32 %v872, %v908
      %v941 = vadd.f32 %v873, %v909
      %v942 = vadd.f32 %v874, %v910
      %v943 = vadd.f32 %v875, %v911
      %v944 = vadd.f32 %v876, %v912
      %v945 = vadd.f32 %v877, %v913
      %v946 = vadd.f32 %v878, %v914
      %v947 = vadd.f32 %v879, %v915
      %v948 = vadd.f32 %v880, %v916
      %v949 = vadd.f32 %v881, %v917
      %v950 = vadd.f32 %v882, %v918
      %v951 = vadd.f32 %v883, %v919
      %v952 = vadd.f32 %v884, %v920
      %v953 = vadd.f32 %v885, %v921
      %v954 = vadd.f32 %v886, %v922
      %v955 = vadd.f32 %v887, %v923
      %v956 = vadd.f32 %v888, %v924
      %v957 = vadd.f32 %v889, %v925
      %v958 = vadd.f32 %v890, %v926
      %v959 = vadd.f32 %v891, %v927
      %v960 = vadd.f32 %v892, %v928
      %v961 = vadd.f32 %v893, %v929
      %v962 = vadd.f32 %v894, %v930
      %v963 = vlaneseq
      %v964 = vshrl.u32 %v963, 7
      %v965 = vsub.s32 5, %v964
      %v966 = vrot.slane %v267, %v965
      %v967 = vmul.f32 %v659, %v966
      %v968 = vmul.f32 %v660, %v966
      %v969 = vmul.f32 %v661, %v966
      %v970 = vmul.f32 %v662, %v966
      %v971 = vmul.f32 %v663, %v966
      %v972 = vmul.f32 %v664, %v966
      %v973 = vmul.f32 %v665, %v966
      %v974 = vmul.f32 %v666, %v966
      %v975 = vmul.f32 %v667, %v966
      %v976 = vmul.f32 %v668, %v966
      %v977 = vmul.f32 %v669, %v966
      %v978 = vmul.f32 %v670, %v966
      %v979 = vmul.f32 %v671, %v966
      %v980 = vmul.f32 %v672, %v966
      %v981 = vmul.f32 %v673, %v966
      %v982 = vmul.f32 %v674, %v966
      %v983 = vmul.f32 %v675, %v966
      %v984 = vmul.f32 %v676, %v966
      %v985 = vmul.f32 %v677, %v966
      %v986 = vmul.f32 %v678, %v966
      %v987 = vmul.f32 %v679, %v966
      %v988 = vmul.f32 %v680, %v966
      %v989 = vmul.f32 %v681, %v966
      %v990 = vmul.f32 %v682, %v966
      %v991 = vmul.f32 %v683, %v966
      %v992 = vmul.f32 %v684, %v966
      %v993 = vmul.f32 %v685, %v966
      %v994 = vmul.f32 %v686, %v966
      %v995 = vmul.f32 %v687, %v966
      %v996 = vmul.f32 %v688, %v966
      %v997 = vmul.f32 %v689, %v966
      %v998 = vmul.f32 %v690, %v966
      %v999 = vadd.f32 %v931, %v967
      %v1000 = vadd.f32 %v932, %v968
      %v1001 = vadd.f32 %v933, %v969
      %v1002 = vadd.f32 %v934, %v970
      %v1003 = vadd.f32 %v935, %v971
      %v1004 = vadd.f32 %v936, %v972
      %v1005 = vadd.f32 %v937, %v973
      %v1006 = vadd.f32 %v938, %v974
      %v1007 = vadd.f32 %v939, %v975
      %v1008 = vadd.f32 %v940, %v976
      %v1009 = vadd.f32 %v941, %v977
      %v1010 = vadd.f32 %v942, %v978
      %v1011 = vadd.f32 %v943, %v979
      %v1012 = vadd.f32 %v944, %v980
      %v1013 = vadd.f32 %v945, %v981
      %v1014 = vadd.f32 %v946, %v982
      %v1015 = vadd.f32 %v947, %v983
      %v1016 = vadd.f32 %v948, %v984
      %v1017 = vadd.f32 %v949, %v985
      %v1018 = vadd.f32 %v950, %v986
      %v1019 = vadd.f32 %v951, %v987
      %v1020 = vadd.f32 %v952, %v988
      %v1021 = vadd.f32 %v953, %v989
      %v1022 = vadd.f32 %v954, %v990
      %v1023 = vadd.f32 %v955, %v991
      %v1024 = vadd.f32 %v956, %v992
      %v1025 = vadd.f32 %v957, %v993
      %v1026 = vadd.f32 %v958, %v994
      %v1027 = vadd.f32 %v959, %v995
      %v1028 = vadd.f32 %v960, %v996
      %v1029 = vadd.f32 %v961, %v997
      %v1030 = vadd.f32 %v962, %v998
      %v1031 = vld [vmem:[%s270 + $0x2] sm:$0xff]
      %v1032 = vld [vmem:[%s270 + $0xa] sm:$0xff]
      %v1033 = vld [vmem:[%s270 + $0x1a] sm:$0xff]
      %v1034 = vld [vmem:[%s270 + $0x22] sm:$0xff]
      %v1035 = vld [vmem:[%s270 + $0x32] sm:$0xff]
      %v1036 = vld [vmem:[%s270 + $0x3a] sm:$0xff]
      %v1037 = vld [vmem:[%s270 + $0x4a] sm:$0xff]
      %v1038 = vld [vmem:[%s270 + $0x52] sm:$0xff]
      %v1039 = vld [vmem:[%s270 + $0x62] sm:$0xff]
      %v1040 = vld [vmem:[%s270 + $0x6a] sm:$0xff]
      %v1041 = vld [vmem:[%s270 + $0x7a] sm:$0xff]
      %v1042 = vld [vmem:[%s270 + $0x82] sm:$0xff]
      %v1043 = vld [vmem:[%s270 + $0x92] sm:$0xff]
      %v1044 = vld [vmem:[%s270 + $0x9a] sm:$0xff]
      %v1045 = vld [vmem:[%s270 + $0xaa] sm:$0xff]
      %v1046 = vld [vmem:[%s270 + $0xb2] sm:$0xff]
      %v1047 = vld [vmem:[%s270 + $0xc2] sm:$0xff]
      %v1048 = vld [vmem:[%s270 + $0xca] sm:$0xff]
      %v1049 = vld [vmem:[%s270 + $0xda] sm:$0xff]
      %v1050 = vld [vmem:[%s270 + $0xe2] sm:$0xff]
      %v1051 = vld [vmem:[%s270 + $0xf2] sm:$0xff]
      %v1052 = vld [vmem:[%s270 + $0xfa] sm:$0xff]
      %v1053 = vld [vmem:[%s270 + $0x10a] sm:$0xff]
      %v1054 = vld [vmem:[%s270 + $0x112] sm:$0xff]
      %v1055 = vld [vmem:[%s270 + $0x122] sm:$0xff]
      %v1056 = vld [vmem:[%s270 + $0x12a] sm:$0xff]
      %v1057 = vld [vmem:[%s270 + $0x13a] sm:$0xff]
      %v1058 = vld [vmem:[%s270 + $0x142] sm:$0xff]
      %v1059 = vld [vmem:[%s270 + $0x152] sm:$0xff]
      %v1060 = vld [vmem:[%s270 + $0x15a] sm:$0xff]
      %v1061 = vld [vmem:[%s270 + $0x16a] sm:$0xff]
      %v1062 = vld [vmem:[%s270 + $0x172] sm:$0xff]
      %v1063 = vld [vmem:[%s270 + $0x182] sm:$0xff]
      %v1064 = vld [vmem:[%s270 + $0x18a] sm:$0xff]
      %v1065 = vld [vmem:[%s270 + $0x19a] sm:$0xff]
      %v1066 = vld [vmem:[%s270 + $0x1a2] sm:$0xff]
      %v1067 = vld [vmem:[%s270 + $0x1b2] sm:$0xff]
      %v1068 = vld [vmem:[%s270 + $0x1ba] sm:$0xff]
      %v1069 = vld [vmem:[%s270 + $0x1ca] sm:$0xff]
      %v1070 = vld [vmem:[%s270 + $0x1d2] sm:$0xff]
      %v1071 = vlaneseq
      %v1072 = vshrl.u32 %v1071, 7
      %v1073 = vsub.s32 2, %v1072
      %v1074 = vrot.slane %v265, %v1073
      %v1075 = vmul.f32 %v1031, %v1074
      %v1076 = vmul.f32 %v1032, %v1074
      %v1077 = vmul.f32 %v1033, %v1074
      %v1078 = vmul.f32 %v1034, %v1074
      %v1079 = vmul.f32 %v1035, %v1074
      %v1080 = vmul.f32 %v1036, %v1074
      %v1081 = vmul.f32 %v1037, %v1074
      %v1082 = vmul.f32 %v1038, %v1074
      %v1083 = vmul.f32 %v1039, %v1074
      %v1084 = vmul.f32 %v1040, %v1074
      %v1085 = vmul.f32 %v1041, %v1074
      %v1086 = vmul.f32 %v1042, %v1074
      %v1087 = vmul.f32 %v1043, %v1074
      %v1088 = vmul.f32 %v1044, %v1074
      %v1089 = vmul.f32 %v1045, %v1074
      %v1090 = vmul.f32 %v1046, %v1074
      %v1091 = vmul.f32 %v1047, %v1074
      %v1092 = vmul.f32 %v1048, %v1074
      %v1093 = vmul.f32 %v1049, %v1074
      %v1094 = vmul.f32 %v1050, %v1074
      %v1095 = vmul.f32 %v1051, %v1074
      %v1096 = vmul.f32 %v1052, %v1074
      %v1097 = vmul.f32 %v1053, %v1074
      %v1098 = vmul.f32 %v1054, %v1074
      %v1099 = vmul.f32 %v1055, %v1074
      %v1100 = vmul.f32 %v1056, %v1074
      %v1101 = vmul.f32 %v1057, %v1074
      %v1102 = vmul.f32 %v1058, %v1074
      %v1103 = vmul.f32 %v1059, %v1074
      %v1104 = vmul.f32 %v1060, %v1074
      %v1105 = vmul.f32 %v1061, %v1074
      %v1106 = vmul.f32 %v1062, %v1074
      %v1107 = vadd.f32 %v999, %v1075
      %v1108 = vadd.f32 %v1000, %v1076
      %v1109 = vadd.f32 %v1001, %v1077
      %v1110 = vadd.f32 %v1002, %v1078
      %v1111 = vadd.f32 %v1003, %v1079
      %v1112 = vadd.f32 %v1004, %v1080
      %v1113 = vadd.f32 %v1005, %v1081
      %v1114 = vadd.f32 %v1006, %v1082
      %v1115 = vadd.f32 %v1007, %v1083
      %v1116 = vadd.f32 %v1008, %v1084
      %v1117 = vadd.f32 %v1009, %v1085
      %v1118 = vadd.f32 %v1010, %v1086
      %v1119 = vadd.f32 %v1011, %v1087
      %v1120 = vadd.f32 %v1012, %v1088
      %v1121 = vadd.f32 %v1013, %v1089
      %v1122 = vadd.f32 %v1014, %v1090
      %v1123 = vadd.f32 %v1015, %v1091
      %v1124 = vadd.f32 %v1016, %v1092
      %v1125 = vadd.f32 %v1017, %v1093
      %v1126 = vadd.f32 %v1018, %v1094
      %v1127 = vadd.f32 %v1019, %v1095
      %v1128 = vadd.f32 %v1020, %v1096
      %v1129 = vadd.f32 %v1021, %v1097
      %v1130 = vadd.f32 %v1022, %v1098
      %v1131 = vadd.f32 %v1023, %v1099
      %v1132 = vadd.f32 %v1024, %v1100
      %v1133 = vadd.f32 %v1025, %v1101
      %v1134 = vadd.f32 %v1026, %v1102
      %v1135 = vadd.f32 %v1027, %v1103
      %v1136 = vadd.f32 %v1028, %v1104
      %v1137 = vadd.f32 %v1029, %v1105
      %v1138 = vadd.f32 %v1030, %v1106
      %v1139 = vlaneseq
      %v1140 = vshrl.u32 %v1139, 7
      %v1141 = vsub.s32 7, %v1140
      %v1142 = vrot.slane %v265, %v1141
      %v1143 = vmul.f32 %v1033, %v1142
      %v1144 = vmul.f32 %v1034, %v1142
      %v1145 = vmul.f32 %v1035, %v1142
      %v1146 = vmul.f32 %v1036, %v1142
      %v1147 = vmul.f32 %v1037, %v1142
      %v1148 = vmul.f32 %v1038, %v1142
      %v1149 = vmul.f32 %v1039, %v1142
      %v1150 = vmul.f32 %v1040, %v1142
      %v1151 = vmul.f32 %v1041, %v1142
      %v1152 = vmul.f32 %v1042, %v1142
      %v1153 = vmul.f32 %v1043, %v1142
      %v1154 = vmul.f32 %v1044, %v1142
      %v1155 = vmul.f32 %v1045, %v1142
      %v1156 = vmul.f32 %v1046, %v1142
      %v1157 = vmul.f32 %v1047, %v1142
      %v1158 = vmul.f32 %v1048, %v1142
      %v1159 = vmul.f32 %v1049, %v1142
      %v1160 = vmul.f32 %v1050, %v1142
      %v1161 = vmul.f32 %v1051, %v1142
      %v1162 = vmul.f32 %v1052, %v1142
      %v1163 = vmul.f32 %v1053, %v1142
      %v1164 = vmul.f32 %v1054, %v1142
      %v1165 = vmul.f32 %v1055, %v1142
      %v1166 = vmul.f32 %v1056, %v1142
      %v1167 = vmul.f32 %v1057, %v1142
      %v1168 = vmul.f32 %v1058, %v1142
      %v1169 = vmul.f32 %v1059, %v1142
      %v1170 = vmul.f32 %v1060, %v1142
      %v1171 = vmul.f32 %v1061, %v1142
      %v1172 = vmul.f32 %v1062, %v1142
      %v1173 = vmul.f32 %v1063, %v1142
      %v1174 = vmul.f32 %v1064, %v1142
      %v1175 = vadd.f32 %v1107, %v1143
      %v1176 = vadd.f32 %v1108, %v1144
      %v1177 = vadd.f32 %v1109, %v1145
      %v1178 = vadd.f32 %v1110, %v1146
      %v1179 = vadd.f32 %v1111, %v1147
      %v1180 = vadd.f32 %v1112, %v1148
      %v1181 = vadd.f32 %v1113, %v1149
      %v1182 = vadd.f32 %v1114, %v1150
      %v1183 = vadd.f32 %v1115, %v1151
      %v1184 = vadd.f32 %v1116, %v1152
      %v1185 = vadd.f32 %v1117, %v1153
      %v1186 = vadd.f32 %v1118, %v1154
      %v1187 = vadd.f32 %v1119, %v1155
      %v1188 = vadd.f32 %v1120, %v1156
      %v1189 = vadd.f32 %v1121, %v1157
      %v1190 = vadd.f32 %v1122, %v1158
      %v1191 = vadd.f32 %v1123, %v1159
      %v1192 = vadd.f32 %v1124, %v1160
      %v1193 = vadd.f32 %v1125, %v1161
      %v1194 = vadd.f32 %v1126, %v1162
      %v1195 = vadd.f32 %v1127, %v1163
      %v1196 = vadd.f32 %v1128, %v1164
      %v1197 = vadd.f32 %v1129, %v1165
      %v1198 = vadd.f32 %v1130, %v1166
      %v1199 = vadd.f32 %v1131, %v1167
      %v1200 = vadd.f32 %v1132, %v1168
      %v1201 = vadd.f32 %v1133, %v1169
      %v1202 = vadd.f32 %v1134, %v1170
      %v1203 = vadd.f32 %v1135, %v1171
      %v1204 = vadd.f32 %v1136, %v1172
      %v1205 = vadd.f32 %v1137, %v1173
      %v1206 = vadd.f32 %v1138, %v1174
      %v1207 = vlaneseq
      %v1208 = vshrl.u32 %v1207, 7
      %v1209 = vsub.s32 4, %v1208
      %v1210 = vrot.slane %v266, %v1209
      %v1211 = vmul.f32 %v1035, %v1210
      %v1212 = vmul.f32 %v1036, %v1210
      %v1213 = vmul.f32 %v1037, %v1210
      %v1214 = vmul.f32 %v1038, %v1210
      %v1215 = vmul.f32 %v1039, %v1210
      %v1216 = vmul.f32 %v1040, %v1210
      %v1217 = vmul.f32 %v1041, %v1210
      %v1218 = vmul.f32 %v1042, %v1210
      %v1219 = vmul.f32 %v1043, %v1210
      %v1220 = vmul.f32 %v1044, %v1210
      %v1221 = vmul.f32 %v1045, %v1210
      %v1222 = vmul.f32 %v1046, %v1210
      %v1223 = vmul.f32 %v1047, %v1210
      %v1224 = vmul.f32 %v1048, %v1210
      %v1225 = vmul.f32 %v1049, %v1210
      %v1226 = vmul.f32 %v1050, %v1210
      %v1227 = vmul.f32 %v1051, %v1210
      %v1228 = vmul.f32 %v1052, %v1210
      %v1229 = vmul.f32 %v1053, %v1210
      %v1230 = vmul.f32 %v1054, %v1210
      %v1231 = vmul.f32 %v1055, %v1210
      %v1232 = vmul.f32 %v1056, %v1210
      %v1233 = vmul.f32 %v1057, %v1210
      %v1234 = vmul.f32 %v1058, %v1210
      %v1235 = vmul.f32 %v1059, %v1210
      %v1236 = vmul.f32 %v1060, %v1210
      %v1237 = vmul.f32 %v1061, %v1210
      %v1238 = vmul.f32 %v1062, %v1210
      %v1239 = vmul.f32 %v1063, %v1210
      %v1240 = vmul.f32 %v1064, %v1210
      %v1241 = vmul.f32 %v1065, %v1210
      %v1242 = vmul.f32 %v1066, %v1210
      %v1243 = vadd.f32 %v1175, %v1211
      %v1244 = vadd.f32 %v1176, %v1212
      %v1245 = vadd.f32 %v1177, %v1213
      %v1246 = vadd.f32 %v1178, %v1214
      %v1247 = vadd.f32 %v1179, %v1215
      %v1248 = vadd.f32 %v1180, %v1216
      %v1249 = vadd.f32 %v1181, %v1217
      %v1250 = vadd.f32 %v1182, %v1218
      %v1251 = vadd.f32 %v1183, %v1219
      %v1252 = vadd.f32 %v1184, %v1220
      %v1253 = vadd.f32 %v1185, %v1221
      %v1254 = vadd.f32 %v1186, %v1222
      %v1255 = vadd.f32 %v1187, %v1223
      %v1256 = vadd.f32 %v1188, %v1224
      %v1257 = vadd.f32 %v1189, %v1225
      %v1258 = vadd.f32 %v1190, %v1226
      %v1259 = vadd.f32 %v1191, %v1227
      %v1260 = vadd.f32 %v1192, %v1228
      %v1261 = vadd.f32 %v1193, %v1229
      %v1262 = vadd.f32 %v1194, %v1230
      %v1263 = vadd.f32 %v1195, %v1231
      %v1264 = vadd.f32 %v1196, %v1232
      %v1265 = vadd.f32 %v1197, %v1233
      %v1266 = vadd.f32 %v1198, %v1234
      %v1267 = vadd.f32 %v1199, %v1235
      %v1268 = vadd.f32 %v1200, %v1236
      %v1269 = vadd.f32 %v1201, %v1237
      %v1270 = vadd.f32 %v1202, %v1238
      %v1271 = vadd.f32 %v1203, %v1239
      %v1272 = vadd.f32 %v1204, %v1240
      %v1273 = vadd.f32 %v1205, %v1241
      %v1274 = vadd.f32 %v1206, %v1242
      %v1275 = vlaneseq
      %v1276 = vshrl.u32 %v1275, 7
      %v1277 = vsub.s32 1, %v1276
      %v1278 = vrot.slane %v267, %v1277
      %v1279 = vmul.f32 %v1037, %v1278
      %v1280 = vmul.f32 %v1038, %v1278
      %v1281 = vmul.f32 %v1039, %v1278
      %v1282 = vmul.f32 %v1040, %v1278
      %v1283 = vmul.f32 %v1041, %v1278
      %v1284 = vmul.f32 %v1042, %v1278
      %v1285 = vmul.f32 %v1043, %v1278
      %v1286 = vmul.f32 %v1044, %v1278
      %v1287 = vmul.f32 %v1045, %v1278
      %v1288 = vmul.f32 %v1046, %v1278
      %v1289 = vmul.f32 %v1047, %v1278
      %v1290 = vmul.f32 %v1048, %v1278
      %v1291 = vmul.f32 %v1049, %v1278
      %v1292 = vmul.f32 %v1050, %v1278
      %v1293 = vmul.f32 %v1051, %v1278
      %v1294 = vmul.f32 %v1052, %v1278
      %v1295 = vmul.f32 %v1053, %v1278
      %v1296 = vmul.f32 %v1054, %v1278
      %v1297 = vmul.f32 %v1055, %v1278
      %v1298 = vmul.f32 %v1056, %v1278
      %v1299 = vmul.f32 %v1057, %v1278
      %v1300 = vmul.f32 %v1058, %v1278
      %v1301 = vmul.f32 %v1059, %v1278
      %v1302 = vmul.f32 %v1060, %v1278
      %v1303 = vmul.f32 %v1061, %v1278
      %v1304 = vmul.f32 %v1062, %v1278
      %v1305 = vmul.f32 %v1063, %v1278
      %v1306 = vmul.f32 %v1064, %v1278
      %v1307 = vmul.f32 %v1065, %v1278
      %v1308 = vmul.f32 %v1066, %v1278
      %v1309 = vmul.f32 %v1067, %v1278
      %v1310 = vmul.f32 %v1068, %v1278
      %v1311 = vadd.f32 %v1243, %v1279
      %v1312 = vadd.f32 %v1244, %v1280
      %v1313 = vadd.f32 %v1245, %v1281
      %v1314 = vadd.f32 %v1246, %v1282
      %v1315 = vadd.f32 %v1247, %v1283
      %v1316 = vadd.f32 %v1248, %v1284
      %v1317 = vadd.f32 %v1249, %v1285
      %v1318 = vadd.f32 %v1250, %v1286
      %v1319 = vadd.f32 %v1251, %v1287
      %v1320 = vadd.f32 %v1252, %v1288
      %v1321 = vadd.f32 %v1253, %v1289
      %v1322 = vadd.f32 %v1254, %v1290
      %v1323 = vadd.f32 %v1255, %v1291
      %v1324 = vadd.f32 %v1256, %v1292
      %v1325 = vadd.f32 %v1257, %v1293
      %v1326 = vadd.f32 %v1258, %v1294
      %v1327 = vadd.f32 %v1259, %v1295
      %v1328 = vadd.f32 %v1260, %v1296
      %v1329 = vadd.f32 %v1261, %v1297
      %v1330 = vadd.f32 %v1262, %v1298
      %v1331 = vadd.f32 %v1263, %v1299
      %v1332 = vadd.f32 %v1264, %v1300
      %v1333 = vadd.f32 %v1265, %v1301
      %v1334 = vadd.f32 %v1266, %v1302
      %v1335 = vadd.f32 %v1267, %v1303
      %v1336 = vadd.f32 %v1268, %v1304
      %v1337 = vadd.f32 %v1269, %v1305
      %v1338 = vadd.f32 %v1270, %v1306
      %v1339 = vadd.f32 %v1271, %v1307
      %v1340 = vadd.f32 %v1272, %v1308
      %v1341 = vadd.f32 %v1273, %v1309
      %v1342 = vadd.f32 %v1274, %v1310
      %v1343 = vlaneseq
      %v1344 = vshrl.u32 %v1343, 7
      %v1345 = vsub.s32 6, %v1344
      %v1346 = vrot.slane %v267, %v1345
      %v1347 = vmul.f32 %v1039, %v1346
      %v1348 = vmul.f32 %v1040, %v1346
      %v1349 = vmul.f32 %v1041, %v1346
      %v1350 = vmul.f32 %v1042, %v1346
      %v1351 = vmul.f32 %v1043, %v1346
      %v1352 = vmul.f32 %v1044, %v1346
      %v1353 = vmul.f32 %v1045, %v1346
      %v1354 = vmul.f32 %v1046, %v1346
      %v1355 = vmul.f32 %v1047, %v1346
      %v1356 = vmul.f32 %v1048, %v1346
      %v1357 = vmul.f32 %v1049, %v1346
      %v1358 = vmul.f32 %v1050, %v1346
      %v1359 = vmul.f32 %v1051, %v1346
      %v1360 = vmul.f32 %v1052, %v1346
      %v1361 = vmul.f32 %v1053, %v1346
      %v1362 = vmul.f32 %v1054, %v1346
      %v1363 = vmul.f32 %v1055, %v1346
      %v1364 = vmul.f32 %v1056, %v1346
      %v1365 = vmul.f32 %v1057, %v1346
      %v1366 = vmul.f32 %v1058, %v1346
      %v1367 = vmul.f32 %v1059, %v1346
      %v1368 = vmul.f32 %v1060, %v1346
      %v1369 = vmul.f32 %v1061, %v1346
      %v1370 = vmul.f32 %v1062, %v1346
      %v1371 = vmul.f32 %v1063, %v1346
      %v1372 = vmul.f32 %v1064, %v1346
      %v1373 = vmul.f32 %v1065, %v1346
      %v1374 = vmul.f32 %v1066, %v1346
      %v1375 = vmul.f32 %v1067, %v1346
      %v1376 = vmul.f32 %v1068, %v1346
      %v1377 = vmul.f32 %v1069, %v1346
      %v1378 = vmul.f32 %v1070, %v1346
      %v1379 = vadd.f32 %v1311, %v1347
      %v1380 = vadd.f32 %v1312, %v1348
      %v1381 = vadd.f32 %v1313, %v1349
      %v1382 = vadd.f32 %v1314, %v1350
      %v1383 = vadd.f32 %v1315, %v1351
      %v1384 = vadd.f32 %v1316, %v1352
      %v1385 = vadd.f32 %v1317, %v1353
      %v1386 = vadd.f32 %v1318, %v1354
      %v1387 = vadd.f32 %v1319, %v1355
      %v1388 = vadd.f32 %v1320, %v1356
      %v1389 = vadd.f32 %v1321, %v1357
      %v1390 = vadd.f32 %v1322, %v1358
      %v1391 = vadd.f32 %v1323, %v1359
      %v1392 = vadd.f32 %v1324, %v1360
      %v1393 = vadd.f32 %v1325, %v1361
      %v1394 = vadd.f32 %v1326, %v1362
      %v1395 = vadd.f32 %v1327, %v1363
      %v1396 = vadd.f32 %v1328, %v1364
      %v1397 = vadd.f32 %v1329, %v1365
      %v1398 = vadd.f32 %v1330, %v1366
      %v1399 = vadd.f32 %v1331, %v1367
      %v1400 = vadd.f32 %v1332, %v1368
      %v1401 = vadd.f32 %v1333, %v1369
      %v1402 = vadd.f32 %v1334, %v1370
      %v1403 = vadd.f32 %v1335, %v1371
      %v1404 = vadd.f32 %v1336, %v1372
      %v1405 = vadd.f32 %v1337, %v1373
      %v1406 = vadd.f32 %v1338, %v1374
      %v1407 = vadd.f32 %v1339, %v1375
      %v1408 = vadd.f32 %v1340, %v1376
      %v1409 = vadd.f32 %v1341, %v1377
      %v1410 = vadd.f32 %v1342, %v1378
      %v1411 = vld [vmem:[%s270 + $0x3] sm:$0xff]
      %v1412 = vld [vmem:[%s270 + $0xb] sm:$0xff]
      %v1413 = vld [vmem:[%s270 + $0x1b] sm:$0xff]
      %v1414 = vld [vmem:[%s270 + $0x23] sm:$0xff]
      %v1415 = vld [vmem:[%s270 + $0x33] sm:$0xff]
      %v1416 = vld [vmem:[%s270 + $0x3b] sm:$0xff]
      %v1417 = vld [vmem:[%s270 + $0x4b] sm:$0xff]
      %v1418 = vld [vmem:[%s270 + $0x53] sm:$0xff]
      %v1419 = vld [vmem:[%s270 + $0x63] sm:$0xff]
      %v1420 = vld [vmem:[%s270 + $0x6b] sm:$0xff]
      %v1421 = vld [vmem:[%s270 + $0x7b] sm:$0xff]
      %v1422 = vld [vmem:[%s270 + $0x83] sm:$0xff]
      %v1423 = vld [vmem:[%s270 + $0x93] sm:$0xff]
      %v1424 = vld [vmem:[%s270 + $0x9b] sm:$0xff]
      %v1425 = vld [vmem:[%s270 + $0xab] sm:$0xff]
      %v1426 = vld [vmem:[%s270 + $0xb3] sm:$0xff]
      %v1427 = vld [vmem:[%s270 + $0xc3] sm:$0xff]
      %v1428 = vld [vmem:[%s270 + $0xcb] sm:$0xff]
      %v1429 = vld [vmem:[%s270 + $0xdb] sm:$0xff]
      %v1430 = vld [vmem:[%s270 + $0xe3] sm:$0xff]
      %v1431 = vld [vmem:[%s270 + $0xf3] sm:$0xff]
      %v1432 = vld [vmem:[%s270 + $0xfb] sm:$0xff]
      %v1433 = vld [vmem:[%s270 + $0x10b] sm:$0xff]
      %v1434 = vld [vmem:[%s270 + $0x113] sm:$0xff]
      %v1435 = vld [vmem:[%s270 + $0x123] sm:$0xff]
      %v1436 = vld [vmem:[%s270 + $0x12b] sm:$0xff]
      %v1437 = vld [vmem:[%s270 + $0x13b] sm:$0xff]
      %v1438 = vld [vmem:[%s270 + $0x143] sm:$0xff]
      %v1439 = vld [vmem:[%s270 + $0x153] sm:$0xff]
      %v1440 = vld [vmem:[%s270 + $0x15b] sm:$0xff]
      %v1441 = vld [vmem:[%s270 + $0x16b] sm:$0xff]
      %v1442 = vld [vmem:[%s270 + $0x173] sm:$0xff]
      %v1443 = vld [vmem:[%s270 + $0x183] sm:$0xff]
      %v1444 = vld [vmem:[%s270 + $0x18b] sm:$0xff]
      %v1445 = vld [vmem:[%s270 + $0x19b] sm:$0xff]
      %v1446 = vld [vmem:[%s270 + $0x1a3] sm:$0xff]
      %v1447 = vld [vmem:[%s270 + $0x1b3] sm:$0xff]
      %v1448 = vld [vmem:[%s270 + $0x1bb] sm:$0xff]
      %v1449 = vld [vmem:[%s270 + $0x1cb] sm:$0xff]
      %v1450 = vld [vmem:[%s270 + $0x1d3] sm:$0xff]
      %v1451 = vlaneseq
      %v1452 = vshrl.u32 %v1451, 7
      %v1453 = vsub.s32 3, %v1452
      %v1454 = vrot.slane %v265, %v1453
      %v1455 = vmul.f32 %v1411, %v1454
      %v1456 = vmul.f32 %v1412, %v1454
      %v1457 = vmul.f32 %v1413, %v1454
      %v1458 = vmul.f32 %v1414, %v1454
      %v1459 = vmul.f32 %v1415, %v1454
      %v1460 = vmul.f32 %v1416, %v1454
      %v1461 = vmul.f32 %v1417, %v1454
      %v1462 = vmul.f32 %v1418, %v1454
      %v1463 = vmul.f32 %v1419, %v1454
      %v1464 = vmul.f32 %v1420, %v1454
      %v1465 = vmul.f32 %v1421, %v1454
      %v1466 = vmul.f32 %v1422, %v1454
      %v1467 = vmul.f32 %v1423, %v1454
      %v1468 = vmul.f32 %v1424, %v1454
      %v1469 = vmul.f32 %v1425, %v1454
      %v1470 = vmul.f32 %v1426, %v1454
      %v1471 = vmul.f32 %v1427, %v1454
      %v1472 = vmul.f32 %v1428, %v1454
      %v1473 = vmul.f32 %v1429, %v1454
      %v1474 = vmul.f32 %v1430, %v1454
      %v1475 = vmul.f32 %v1431, %v1454
      %v1476 = vmul.f32 %v1432, %v1454
      %v1477 = vmul.f32 %v1433, %v1454
      %v1478 = vmul.f32 %v1434, %v1454
      %v1479 = vmul.f32 %v1435, %v1454
      %v1480 = vmul.f32 %v1436, %v1454
      %v1481 = vmul.f32 %v1437, %v1454
      %v1482 = vmul.f32 %v1438, %v1454
      %v1483 = vmul.f32 %v1439, %v1454
      %v1484 = vmul.f32 %v1440, %v1454
      %v1485 = vmul.f32 %v1441, %v1454
      %v1486 = vmul.f32 %v1442, %v1454
      %v1487 = vadd.f32 %v1379, %v1455
      %v1488 = vadd.f32 %v1380, %v1456
      %v1489 = vadd.f32 %v1381, %v1457
      %v1490 = vadd.f32 %v1382, %v1458
      %v1491 = vadd.f32 %v1383, %v1459
      %v1492 = vadd.f32 %v1384, %v1460
      %v1493 = vadd.f32 %v1385, %v1461
      %v1494 = vadd.f32 %v1386, %v1462
      %v1495 = vadd.f32 %v1387, %v1463
      %v1496 = vadd.f32 %v1388, %v1464
      %v1497 = vadd.f32 %v1389, %v1465
      %v1498 = vadd.f32 %v1390, %v1466
      %v1499 = vadd.f32 %v1391, %v1467
      %v1500 = vadd.f32 %v1392, %v1468
      %v1501 = vadd.f32 %v1393, %v1469
      %v1502 = vadd.f32 %v1394, %v1470
      %v1503 = vadd.f32 %v1395, %v1471
      %v1504 = vadd.f32 %v1396, %v1472
      %v1505 = vadd.f32 %v1397, %v1473
      %v1506 = vadd.f32 %v1398, %v1474
      %v1507 = vadd.f32 %v1399, %v1475
      %v1508 = vadd.f32 %v1400, %v1476
      %v1509 = vadd.f32 %v1401, %v1477
      %v1510 = vadd.f32 %v1402, %v1478
      %v1511 = vadd.f32 %v1403, %v1479
      %v1512 = vadd.f32 %v1404, %v1480
      %v1513 = vadd.f32 %v1405, %v1481
      %v1514 = vadd.f32 %v1406, %v1482
      %v1515 = vadd.f32 %v1407, %v1483
      %v1516 = vadd.f32 %v1408, %v1484
      %v1517 = vadd.f32 %v1409, %v1485
      %v1518 = vadd.f32 %v1410, %v1486
      %v1519 = vlaneseq
      %v1520 = vshrl.u32 %v1519, 7
      %v1521 = vsub.s32 0, %v1520
      %v1522 = vrot.slane %v266, %v1521
      %v1523 = vmul.f32 %v1413, %v1522
      %v1524 = vmul.f32 %v1414, %v1522
      %v1525 = vmul.f32 %v1415, %v1522
      %v1526 = vmul.f32 %v1416, %v1522
      %v1527 = vmul.f32 %v1417, %v1522
      %v1528 = vmul.f32 %v1418, %v1522
      %v1529 = vmul.f32 %v1419, %v1522
      %v1530 = vmul.f32 %v1420, %v1522
      %v1531 = vmul.f32 %v1421, %v1522
      %v1532 = vmul.f32 %v1422, %v1522
      %v1533 = vmul.f32 %v1423, %v1522
      %v1534 = vmul.f32 %v1424, %v1522
      %v1535 = vmul.f32 %v1425, %v1522
      %v1536 = vmul.f32 %v1426, %v1522
      %v1537 = vmul.f32 %v1427, %v1522
      %v1538 = vmul.f32 %v1428, %v1522
      %v1539 = vmul.f32 %v1429, %v1522
      %v1540 = vmul.f32 %v1430, %v1522
      %v1541 = vmul.f32 %v1431, %v1522
      %v1542 = vmul.f32 %v1432, %v1522
      %v1543 = vmul.f32 %v1433, %v1522
      %v1544 = vmul.f32 %v1434, %v1522
      %v1545 = vmul.f32 %v1435, %v1522
      %v1546 = vmul.f32 %v1436, %v1522
      %v1547 = vmul.f32 %v1437, %v1522
      %v1548 = vmul.f32 %v1438, %v1522
      %v1549 = vmul.f32 %v1439, %v1522
      %v1550 = vmul.f32 %v1440, %v1522
      %v1551 = vmul.f32 %v1441, %v1522
      %v1552 = vmul.f32 %v1442, %v1522
      %v1553 = vmul.f32 %v1443, %v1522
      %v1554 = vmul.f32 %v1444, %v1522
      %v1555 = vadd.f32 %v1487, %v1523
      %v1556 = vadd.f32 %v1488, %v1524
      %v1557 = vadd.f32 %v1489, %v1525
      %v1558 = vadd.f32 %v1490, %v1526
      %v1559 = vadd.f32 %v1491, %v1527
      %v1560 = vadd.f32 %v1492, %v1528
      %v1561 = vadd.f32 %v1493, %v1529
      %v1562 = vadd.f32 %v1494, %v1530
      %v1563 = vadd.f32 %v1495, %v1531
      %v1564 = vadd.f32 %v1496, %v1532
      %v1565 = vadd.f32 %v1497, %v1533
      %v1566 = vadd.f32 %v1498, %v1534
      %v1567 = vadd.f32 %v1499, %v1535
      %v1568 = vadd.f32 %v1500, %v1536
      %v1569 = vadd.f32 %v1501, %v1537
      %v1570 = vadd.f32 %v1502, %v1538
      %v1571 = vadd.f32 %v1503, %v1539
      %v1572 = vadd.f32 %v1504, %v1540
      %v1573 = vadd.f32 %v1505, %v1541
      %v1574 = vadd.f32 %v1506, %v1542
      %v1575 = vadd.f32 %v1507, %v1543
      %v1576 = vadd.f32 %v1508, %v1544
      %v1577 = vadd.f32 %v1509, %v1545
      %v1578 = vadd.f32 %v1510, %v1546
      %v1579 = vadd.f32 %v1511, %v1547
      %v1580 = vadd.f32 %v1512, %v1548
      %v1581 = vadd.f32 %v1513, %v1549
      %v1582 = vadd.f32 %v1514, %v1550
      %v1583 = vadd.f32 %v1515, %v1551
      %v1584 = vadd.f32 %v1516, %v1552
      %v1585 = vadd.f32 %v1517, %v1553
      %v1586 = vadd.f32 %v1518, %v1554
      %v1587 = vlaneseq
      %v1588 = vshrl.u32 %v1587, 7
      %v1589 = vsub.s32 5, %v1588
      %v1590 = vrot.slane %v266, %v1589
      %v1591 = vmul.f32 %v1415, %v1590
      %v1592 = vmul.f32 %v1416, %v1590
      %v1593 = vmul.f32 %v1417, %v1590
      %v1594 = vmul.f32 %v1418, %v1590
      %v1595 = vmul.f32 %v1419, %v1590
      %v1596 = vmul.f32 %v1420, %v1590
      %v1597 = vmul.f32 %v1421, %v1590
      %v1598 = vmul.f32 %v1422, %v1590
      %v1599 = vmul.f32 %v1423, %v1590
      %v1600 = vmul.f32 %v1424, %v1590
      %v1601 = vmul.f32 %v1425, %v1590
      %v1602 = vmul.f32 %v1426, %v1590
      %v1603 = vmul.f32 %v1427, %v1590
      %v1604 = vmul.f32 %v1428, %v1590
      %v1605 = vmul.f32 %v1429, %v1590
      %v1606 = vmul.f32 %v1430, %v1590
      %v1607 = vmul.f32 %v1431, %v1590
      %v1608 = vmul.f32 %v1432, %v1590
      %v1609 = vmul.f32 %v1433, %v1590
      %v1610 = vmul.f32 %v1434, %v1590
      %v1611 = vmul.f32 %v1435, %v1590
      %v1612 = vmul.f32 %v1436, %v1590
      %v1613 = vmul.f32 %v1437, %v1590
      %v1614 = vmul.f32 %v1438, %v1590
      %v1615 = vmul.f32 %v1439, %v1590
      %v1616 = vmul.f32 %v1440, %v1590
      %v1617 = vmul.f32 %v1441, %v1590
      %v1618 = vmul.f32 %v1442, %v1590
      %v1619 = vmul.f32 %v1443, %v1590
      %v1620 = vmul.f32 %v1444, %v1590
      %v1621 = vmul.f32 %v1445, %v1590
      %v1622 = vmul.f32 %v1446, %v1590
      %v1623 = vadd.f32 %v1555, %v1591
      %v1624 = vadd.f32 %v1556, %v1592
      %v1625 = vadd.f32 %v1557, %v1593
      %v1626 = vadd.f32 %v1558, %v1594
      %v1627 = vadd.f32 %v1559, %v1595
      %v1628 = vadd.f32 %v1560, %v1596
      %v1629 = vadd.f32 %v1561, %v1597
      %v1630 = vadd.f32 %v1562, %v1598
      %v1631 = vadd.f32 %v1563, %v1599
      %v1632 = vadd.f32 %v1564, %v1600
      %v1633 = vadd.f32 %v1565, %v1601
      %v1634 = vadd.f32 %v1566, %v1602
      %v1635 = vadd.f32 %v1567, %v1603
      %v1636 = vadd.f32 %v1568, %v1604
      %v1637 = vadd.f32 %v1569, %v1605
      %v1638 = vadd.f32 %v1570, %v1606
      %v1639 = vadd.f32 %v1571, %v1607
      %v1640 = vadd.f32 %v1572, %v1608
      %v1641 = vadd.f32 %v1573, %v1609
      %v1642 = vadd.f32 %v1574, %v1610
      %v1643 = vadd.f32 %v1575, %v1611
      %v1644 = vadd.f32 %v1576, %v1612
      %v1645 = vadd.f32 %v1577, %v1613
      %v1646 = vadd.f32 %v1578, %v1614
      %v1647 = vadd.f32 %v1579, %v1615
      %v1648 = vadd.f32 %v1580, %v1616
      %v1649 = vadd.f32 %v1581, %v1617
      %v1650 = vadd.f32 %v1582, %v1618
      %v1651 = vadd.f32 %v1583, %v1619
      %v1652 = vadd.f32 %v1584, %v1620
      %v1653 = vadd.f32 %v1585, %v1621
      %v1654 = vadd.f32 %v1586, %v1622
      %v1655 = vlaneseq
      %v1656 = vshrl.u32 %v1655, 7
      %v1657 = vsub.s32 2, %v1656
      %v1658 = vrot.slane %v267, %v1657
      %v1659 = vmul.f32 %v1417, %v1658
      %v1660 = vmul.f32 %v1418, %v1658
      %v1661 = vmul.f32 %v1419, %v1658
      %v1662 = vmul.f32 %v1420, %v1658
      %v1663 = vmul.f32 %v1421, %v1658
      %v1664 = vmul.f32 %v1422, %v1658
      %v1665 = vmul.f32 %v1423, %v1658
      %v1666 = vmul.f32 %v1424, %v1658
      %v1667 = vmul.f32 %v1425, %v1658
      %v1668 = vmul.f32 %v1426, %v1658
      %v1669 = vmul.f32 %v1427, %v1658
      %v1670 = vmul.f32 %v1428, %v1658
      %v1671 = vmul.f32 %v1429, %v1658
      %v1672 = vmul.f32 %v1430, %v1658
      %v1673 = vmul.f32 %v1431, %v1658
      %v1674 = vmul.f32 %v1432, %v1658
      %v1675 = vmul.f32 %v1433, %v1658
      %v1676 = vmul.f32 %v1434, %v1658
      %v1677 = vmul.f32 %v1435, %v1658
      %v1678 = vmul.f32 %v1436, %v1658
      %v1679 = vmul.f32 %v1437, %v1658
      %v1680 = vmul.f32 %v1438, %v1658
      %v1681 = vmul.f32 %v1439, %v1658
      %v1682 = vmul.f32 %v1440, %v1658
      %v1683 = vmul.f32 %v1441, %v1658
      %v1684 = vmul.f32 %v1442, %v1658
      %v1685 = vmul.f32 %v1443, %v1658
      %v1686 = vmul.f32 %v1444, %v1658
      %v1687 = vmul.f32 %v1445, %v1658
      %v1688 = vmul.f32 %v1446, %v1658
      %v1689 = vmul.f32 %v1447, %v1658
      %v1690 = vmul.f32 %v1448, %v1658
      %v1691 = vadd.f32 %v1623, %v1659
      %v1692 = vadd.f32 %v1624, %v1660
      %v1693 = vadd.f32 %v1625, %v1661
      %v1694 = vadd.f32 %v1626, %v1662
      %v1695 = vadd.f32 %v1627, %v1663
      %v1696 = vadd.f32 %v1628, %v1664
      %v1697 = vadd.f32 %v1629, %v1665
      %v1698 = vadd.f32 %v1630, %v1666
      %v1699 = vadd.f32 %v1631, %v1667
      %v1700 = vadd.f32 %v1632, %v1668
      %v1701 = vadd.f32 %v1633, %v1669
      %v1702 = vadd.f32 %v1634, %v1670
      %v1703 = vadd.f32 %v1635, %v1671
      %v1704 = vadd.f32 %v1636, %v1672
      %v1705 = vadd.f32 %v1637, %v1673
      %v1706 = vadd.f32 %v1638, %v1674
      %v1707 = vadd.f32 %v1639, %v1675
      %v1708 = vadd.f32 %v1640, %v1676
      %v1709 = vadd.f32 %v1641, %v1677
      %v1710 = vadd.f32 %v1642, %v1678
      %v1711 = vadd.f32 %v1643, %v1679
      %v1712 = vadd.f32 %v1644, %v1680
      %v1713 = vadd.f32 %v1645, %v1681
      %v1714 = vadd.f32 %v1646, %v1682
      %v1715 = vadd.f32 %v1647, %v1683
      %v1716 = vadd.f32 %v1648, %v1684
      %v1717 = vadd.f32 %v1649, %v1685
      %v1718 = vadd.f32 %v1650, %v1686
      %v1719 = vadd.f32 %v1651, %v1687
      %v1720 = vadd.f32 %v1652, %v1688
      %v1721 = vadd.f32 %v1653, %v1689
      %v1722 = vadd.f32 %v1654, %v1690
      %v1723 = vlaneseq
      %v1724 = vshrl.u32 %v1723, 7
      %v1725 = vsub.s32 7, %v1724
      %v1726 = vrot.slane %v267, %v1725
      %v1727 = vmul.f32 %v1419, %v1726
      %v1728 = vmul.f32 %v1420, %v1726
      %v1729 = vmul.f32 %v1421, %v1726
      %v1730 = vmul.f32 %v1422, %v1726
      %v1731 = vmul.f32 %v1423, %v1726
      %v1732 = vmul.f32 %v1424, %v1726
      %v1733 = vmul.f32 %v1425, %v1726
      %v1734 = vmul.f32 %v1426, %v1726
      %v1735 = vmul.f32 %v1427, %v1726
      %v1736 = vmul.f32 %v1428, %v1726
      %v1737 = vmul.f32 %v1429, %v1726
      %v1738 = vmul.f32 %v1430, %v1726
      %v1739 = vmul.f32 %v1431, %v1726
      %v1740 = vmul.f32 %v1432, %v1726
      %v1741 = vmul.f32 %v1433, %v1726
      %v1742 = vmul.f32 %v1434, %v1726
      %v1743 = vmul.f32 %v1435, %v1726
      %v1744 = vmul.f32 %v1436, %v1726
      %v1745 = vmul.f32 %v1437, %v1726
      %v1746 = vmul.f32 %v1438, %v1726
      %v1747 = vmul.f32 %v1439, %v1726
      %v1748 = vmul.f32 %v1440, %v1726
      %v1749 = vmul.f32 %v1441, %v1726
      %v1750 = vmul.f32 %v1442, %v1726
      %v1751 = vmul.f32 %v1443, %v1726
      %v1752 = vmul.f32 %v1444, %v1726
      %v1753 = vmul.f32 %v1445, %v1726
      %v1754 = vmul.f32 %v1446, %v1726
      %v1755 = vmul.f32 %v1447, %v1726
      %v1756 = vmul.f32 %v1448, %v1726
      %v1757 = vmul.f32 %v1449, %v1726
      %v1758 = vmul.f32 %v1450, %v1726
      %v1759 = vadd.f32 %v1691, %v1727
      %v1760 = vadd.f32 %v1692, %v1728
      %v1761 = vadd.f32 %v1693, %v1729
      %v1762 = vadd.f32 %v1694, %v1730
      %v1763 = vadd.f32 %v1695, %v1731
      %v1764 = vadd.f32 %v1696, %v1732
      %v1765 = vadd.f32 %v1697, %v1733
      %v1766 = vadd.f32 %v1698, %v1734
      %v1767 = vadd.f32 %v1699, %v1735
      %v1768 = vadd.f32 %v1700, %v1736
      %v1769 = vadd.f32 %v1701, %v1737
      %v1770 = vadd.f32 %v1702, %v1738
      %v1771 = vadd.f32 %v1703, %v1739
      %v1772 = vadd.f32 %v1704, %v1740
      %v1773 = vadd.f32 %v1705, %v1741
      %v1774 = vadd.f32 %v1706, %v1742
      %v1775 = vadd.f32 %v1707, %v1743
      %v1776 = vadd.f32 %v1708, %v1744
      %v1777 = vadd.f32 %v1709, %v1745
      %v1778 = vadd.f32 %v1710, %v1746
      %v1779 = vadd.f32 %v1711, %v1747
      %v1780 = vadd.f32 %v1712, %v1748
      %v1781 = vadd.f32 %v1713, %v1749
      %v1782 = vadd.f32 %v1714, %v1750
      %v1783 = vadd.f32 %v1715, %v1751
      %v1784 = vadd.f32 %v1716, %v1752
      %v1785 = vadd.f32 %v1717, %v1753
      %v1786 = vadd.f32 %v1718, %v1754
      %v1787 = vadd.f32 %v1719, %v1755
      %v1788 = vadd.f32 %v1720, %v1756
      %v1789 = vadd.f32 %v1721, %v1757
      %v1790 = vadd.f32 %v1722, %v1758
      %v1791 = vld [vmem:[%s270 + $0x4] sm:$0xff]
      %v1792 = vld [vmem:[%s270 + $0xc] sm:$0xff]
      %v1793 = vld [vmem:[%s270 + $0x1c] sm:$0xff]
      %v1794 = vld [vmem:[%s270 + $0x24] sm:$0xff]
      %v1795 = vld [vmem:[%s270 + $0x34] sm:$0xff]
      %v1796 = vld [vmem:[%s270 + $0x3c] sm:$0xff]
      %v1797 = vld [vmem:[%s270 + $0x4c] sm:$0xff]
      %v1798 = vld [vmem:[%s270 + $0x54] sm:$0xff]
      %v1799 = vld [vmem:[%s270 + $0x64] sm:$0xff]
      %v1800 = vld [vmem:[%s270 + $0x6c] sm:$0xff]
      %v1801 = vld [vmem:[%s270 + $0x7c] sm:$0xff]
      %v1802 = vld [vmem:[%s270 + $0x84] sm:$0xff]
      %v1803 = vld [vmem:[%s270 + $0x94] sm:$0xff]
      %v1804 = vld [vmem:[%s270 + $0x9c] sm:$0xff]
      %v1805 = vld [vmem:[%s270 + $0xac] sm:$0xff]
      %v1806 = vld [vmem:[%s270 + $0xb4] sm:$0xff]
      %v1807 = vld [vmem:[%s270 + $0xc4] sm:$0xff]
      %v1808 = vld [vmem:[%s270 + $0xcc] sm:$0xff]
      %v1809 = vld [vmem:[%s270 + $0xdc] sm:$0xff]
      %v1810 = vld [vmem:[%s270 + $0xe4] sm:$0xff]
      %v1811 = vld [vmem:[%s270 + $0xf4] sm:$0xff]
      %v1812 = vld [vmem:[%s270 + $0xfc] sm:$0xff]
      %v1813 = vld [vmem:[%s270 + $0x10c] sm:$0xff]
      %v1814 = vld [vmem:[%s270 + $0x114] sm:$0xff]
      %v1815 = vld [vmem:[%s270 + $0x124] sm:$0xff]
      %v1816 = vld [vmem:[%s270 + $0x12c] sm:$0xff]
      %v1817 = vld [vmem:[%s270 + $0x13c] sm:$0xff]
      %v1818 = vld [vmem:[%s270 + $0x144] sm:$0xff]
      %v1819 = vld [vmem:[%s270 + $0x154] sm:$0xff]
      %v1820 = vld [vmem:[%s270 + $0x15c] sm:$0xff]
      %v1821 = vld [vmem:[%s270 + $0x16c] sm:$0xff]
      %v1822 = vld [vmem:[%s270 + $0x174] sm:$0xff]
      %v1823 = vld [vmem:[%s270 + $0x184] sm:$0xff]
      %v1824 = vld [vmem:[%s270 + $0x18c] sm:$0xff]
      %v1825 = vld [vmem:[%s270 + $0x19c] sm:$0xff]
      %v1826 = vld [vmem:[%s270 + $0x1a4] sm:$0xff]
      %v1827 = vld [vmem:[%s270 + $0x1b4] sm:$0xff]
      %v1828 = vld [vmem:[%s270 + $0x1bc] sm:$0xff]
      %v1829 = vld [vmem:[%s270 + $0x1cc] sm:$0xff]
      %v1830 = vld [vmem:[%s270 + $0x1d4] sm:$0xff]
      %v1831 = vlaneseq
      %v1832 = vshrl.u32 %v1831, 7
      %v1833 = vsub.s32 4, %v1832
      %v1834 = vrot.slane %v265, %v1833
      %v1835 = vmul.f32 %v1791, %v1834
      %v1836 = vmul.f32 %v1792, %v1834
      %v1837 = vmul.f32 %v1793, %v1834
      %v1838 = vmul.f32 %v1794, %v1834
      %v1839 = vmul.f32 %v1795, %v1834
      %v1840 = vmul.f32 %v1796, %v1834
      %v1841 = vmul.f32 %v1797, %v1834
      %v1842 = vmul.f32 %v1798, %v1834
      %v1843 = vmul.f32 %v1799, %v1834
      %v1844 = vmul.f32 %v1800, %v1834
      %v1845 = vmul.f32 %v1801, %v1834
      %v1846 = vmul.f32 %v1802, %v1834
      %v1847 = vmul.f32 %v1803, %v1834
      %v1848 = vmul.f32 %v1804, %v1834
      %v1849 = vmul.f32 %v1805, %v1834
      %v1850 = vmul.f32 %v1806, %v1834
      %v1851 = vmul.f32 %v1807, %v1834
      %v1852 = vmul.f32 %v1808, %v1834
      %v1853 = vmul.f32 %v1809, %v1834
      %v1854 = vmul.f32 %v1810, %v1834
      %v1855 = vmul.f32 %v1811, %v1834
      %v1856 = vmul.f32 %v1812, %v1834
      %v1857 = vmul.f32 %v1813, %v1834
      %v1858 = vmul.f32 %v1814, %v1834
      %v1859 = vmul.f32 %v1815, %v1834
      %v1860 = vmul.f32 %v1816, %v1834
      %v1861 = vmul.f32 %v1817, %v1834
      %v1862 = vmul.f32 %v1818, %v1834
      %v1863 = vmul.f32 %v1819, %v1834
      %v1864 = vmul.f32 %v1820, %v1834
      %v1865 = vmul.f32 %v1821, %v1834
      %v1866 = vmul.f32 %v1822, %v1834
      %v1867 = vadd.f32 %v1759, %v1835
      %v1868 = vadd.f32 %v1760, %v1836
      %v1869 = vadd.f32 %v1761, %v1837
      %v1870 = vadd.f32 %v1762, %v1838
      %v1871 = vadd.f32 %v1763, %v1839
      %v1872 = vadd.f32 %v1764, %v1840
      %v1873 = vadd.f32 %v1765, %v1841
      %v1874 = vadd.f32 %v1766, %v1842
      %v1875 = vadd.f32 %v1767, %v1843
      %v1876 = vadd.f32 %v1768, %v1844
      %v1877 = vadd.f32 %v1769, %v1845
      %v1878 = vadd.f32 %v1770, %v1846
      %v1879 = vadd.f32 %v1771, %v1847
      %v1880 = vadd.f32 %v1772, %v1848
      %v1881 = vadd.f32 %v1773, %v1849
      %v1882 = vadd.f32 %v1774, %v1850
      %v1883 = vadd.f32 %v1775, %v1851
      %v1884 = vadd.f32 %v1776, %v1852
      %v1885 = vadd.f32 %v1777, %v1853
      %v1886 = vadd.f32 %v1778, %v1854
      %v1887 = vadd.f32 %v1779, %v1855
      %v1888 = vadd.f32 %v1780, %v1856
      %v1889 = vadd.f32 %v1781, %v1857
      %v1890 = vadd.f32 %v1782, %v1858
      %v1891 = vadd.f32 %v1783, %v1859
      %v1892 = vadd.f32 %v1784, %v1860
      %v1893 = vadd.f32 %v1785, %v1861
      %v1894 = vadd.f32 %v1786, %v1862
      %v1895 = vadd.f32 %v1787, %v1863
      %v1896 = vadd.f32 %v1788, %v1864
      %v1897 = vadd.f32 %v1789, %v1865
      %v1898 = vadd.f32 %v1790, %v1866
      %v1899 = vlaneseq
      %v1900 = vshrl.u32 %v1899, 7
      %v1901 = vsub.s32 1, %v1900
      %v1902 = vrot.slane %v266, %v1901
      %v1903 = vmul.f32 %v1793, %v1902
      %v1904 = vmul.f32 %v1794, %v1902
      %v1905 = vmul.f32 %v1795, %v1902
      %v1906 = vmul.f32 %v1796, %v1902
      %v1907 = vmul.f32 %v1797, %v1902
      %v1908 = vmul.f32 %v1798, %v1902
      %v1909 = vmul.f32 %v1799, %v1902
      %v1910 = vmul.f32 %v1800, %v1902
      %v1911 = vmul.f32 %v1801, %v1902
      %v1912 = vmul.f32 %v1802, %v1902
      %v1913 = vmul.f32 %v1803, %v1902
      %v1914 = vmul.f32 %v1804, %v1902
      %v1915 = vmul.f32 %v1805, %v1902
      %v1916 = vmul.f32 %v1806, %v1902
      %v1917 = vmul.f32 %v1807, %v1902
      %v1918 = vmul.f32 %v1808, %v1902
      %v1919 = vmul.f32 %v1809, %v1902
      %v1920 = vmul.f32 %v1810, %v1902
      %v1921 = vmul.f32 %v1811, %v1902
      %v1922 = vmul.f32 %v1812, %v1902
      %v1923 = vmul.f32 %v1813, %v1902
      %v1924 = vmul.f32 %v1814, %v1902
      %v1925 = vmul.f32 %v1815, %v1902
      %v1926 = vmul.f32 %v1816, %v1902
      %v1927 = vmul.f32 %v1817, %v1902
      %v1928 = vmul.f32 %v1818, %v1902
      %v1929 = vmul.f32 %v1819, %v1902
      %v1930 = vmul.f32 %v1820, %v1902
      %v1931 = vmul.f32 %v1821, %v1902
      %v1932 = vmul.f32 %v1822, %v1902
      %v1933 = vmul.f32 %v1823, %v1902
      %v1934 = vmul.f32 %v1824, %v1902
      %v1935 = vadd.f32 %v1867, %v1903
      %v1936 = vadd.f32 %v1868, %v1904
      %v1937 = vadd.f32 %v1869, %v1905
      %v1938 = vadd.f32 %v1870, %v1906
      %v1939 = vadd.f32 %v1871, %v1907
      %v1940 = vadd.f32 %v1872, %v1908
      %v1941 = vadd.f32 %v1873, %v1909
      %v1942 = vadd.f32 %v1874, %v1910
      %v1943 = vadd.f32 %v1875, %v1911
      %v1944 = vadd.f32 %v1876, %v1912
      %v1945 = vadd.f32 %v1877, %v1913
      %v1946 = vadd.f32 %v1878, %v1914
      %v1947 = vadd.f32 %v1879, %v1915
      %v1948 = vadd.f32 %v1880, %v1916
      %v1949 = vadd.f32 %v1881, %v1917
      %v1950 = vadd.f32 %v1882, %v1918
      %v1951 = vadd.f32 %v1883, %v1919
      %v1952 = vadd.f32 %v1884, %v1920
      %v1953 = vadd.f32 %v1885, %v1921
      %v1954 = vadd.f32 %v1886, %v1922
      %v1955 = vadd.f32 %v1887, %v1923
      %v1956 = vadd.f32 %v1888, %v1924
      %v1957 = vadd.f32 %v1889, %v1925
      %v1958 = vadd.f32 %v1890, %v1926
      %v1959 = vadd.f32 %v1891, %v1927
      %v1960 = vadd.f32 %v1892, %v1928
      %v1961 = vadd.f32 %v1893, %v1929
      %v1962 = vadd.f32 %v1894, %v1930
      %v1963 = vadd.f32 %v1895, %v1931
      %v1964 = vadd.f32 %v1896, %v1932
      %v1965 = vadd.f32 %v1897, %v1933
      %v1966 = vadd.f32 %v1898, %v1934
      %v1967 = vlaneseq
      %v1968 = vshrl.u32 %v1967, 7
      %v1969 = vsub.s32 6, %v1968
      %v1970 = vrot.slane %v266, %v1969
      %v1971 = vmul.f32 %v1795, %v1970
      %v1972 = vmul.f32 %v1796, %v1970
      %v1973 = vmul.f32 %v1797, %v1970
      %v1974 = vmul.f32 %v1798, %v1970
      %v1975 = vmul.f32 %v1799, %v1970
      %v1976 = vmul.f32 %v1800, %v1970
      %v1977 = vmul.f32 %v1801, %v1970
      %v1978 = vmul.f32 %v1802, %v1970
      %v1979 = vmul.f32 %v1803, %v1970
      %v1980 = vmul.f32 %v1804, %v1970
      %v1981 = vmul.f32 %v1805, %v1970
      %v1982 = vmul.f32 %v1806, %v1970
      %v1983 = vmul.f32 %v1807, %v1970
      %v1984 = vmul.f32 %v1808, %v1970
      %v1985 = vmul.f32 %v1809, %v1970
      %v1986 = vmul.f32 %v1810, %v1970
      %v1987 = vmul.f32 %v1811, %v1970
      %v1988 = vmul.f32 %v1812, %v1970
      %v1989 = vmul.f32 %v1813, %v1970
      %v1990 = vmul.f32 %v1814, %v1970
      %v1991 = vmul.f32 %v1815, %v1970
      %v1992 = vmul.f32 %v1816, %v1970
      %v1993 = vmul.f32 %v1817, %v1970
      %v1994 = vmul.f32 %v1818, %v1970
      %v1995 = vmul.f32 %v1819, %v1970
      %v1996 = vmul.f32 %v1820, %v1970
      %v1997 = vmul.f32 %v1821, %v1970
      %v1998 = vmul.f32 %v1822, %v1970
      %v1999 = vmul.f32 %v1823, %v1970
      %v2000 = vmul.f32 %v1824, %v1970
      %v2001 = vmul.f32 %v1825, %v1970
      %v2002 = vmul.f32 %v1826, %v1970
      %v2003 = vadd.f32 %v1935, %v1971
      %v2004 = vadd.f32 %v1936, %v1972
      %v2005 = vadd.f32 %v1937, %v1973
      %v2006 = vadd.f32 %v1938, %v1974
      %v2007 = vadd.f32 %v1939, %v1975
      %v2008 = vadd.f32 %v1940, %v1976
      %v2009 = vadd.f32 %v1941, %v1977
      %v2010 = vadd.f32 %v1942, %v1978
      %v2011 = vadd.f32 %v1943, %v1979
      %v2012 = vadd.f32 %v1944, %v1980
      %v2013 = vadd.f32 %v1945, %v1981
      %v2014 = vadd.f32 %v1946, %v1982
      %v2015 = vadd.f32 %v1947, %v1983
      %v2016 = vadd.f32 %v1948, %v1984
      %v2017 = vadd.f32 %v1949, %v1985
      %v2018 = vadd.f32 %v1950, %v1986
      %v2019 = vadd.f32 %v1951, %v1987
      %v2020 = vadd.f32 %v1952, %v1988
      %v2021 = vadd.f32 %v1953, %v1989
      %v2022 = vadd.f32 %v1954, %v1990
      %v2023 = vadd.f32 %v1955, %v1991
      %v2024 = vadd.f32 %v1956, %v1992
      %v2025 = vadd.f32 %v1957, %v1993
      %v2026 = vadd.f32 %v1958, %v1994
      %v2027 = vadd.f32 %v1959, %v1995
      %v2028 = vadd.f32 %v1960, %v1996
      %v2029 = vadd.f32 %v1961, %v1997
      %v2030 = vadd.f32 %v1962, %v1998
      %v2031 = vadd.f32 %v1963, %v1999
      %v2032 = vadd.f32 %v1964, %v2000
      %v2033 = vadd.f32 %v1965, %v2001
      %v2034 = vadd.f32 %v1966, %v2002
      %v2035 = vlaneseq
      %v2036 = vshrl.u32 %v2035, 7
      %v2037 = vsub.s32 3, %v2036
      %v2038 = vrot.slane %v267, %v2037
      %v2039 = vmul.f32 %v1797, %v2038
      %v2040 = vmul.f32 %v1798, %v2038
      %v2041 = vmul.f32 %v1799, %v2038
      %v2042 = vmul.f32 %v1800, %v2038
      %v2043 = vmul.f32 %v1801, %v2038
      %v2044 = vmul.f32 %v1802, %v2038
      %v2045 = vmul.f32 %v1803, %v2038
      %v2046 = vmul.f32 %v1804, %v2038
      %v2047 = vmul.f32 %v1805, %v2038
      %v2048 = vmul.f32 %v1806, %v2038
      %v2049 = vmul.f32 %v1807, %v2038
      %v2050 = vmul.f32 %v1808, %v2038
      %v2051 = vmul.f32 %v1809, %v2038
      %v2052 = vmul.f32 %v1810, %v2038
      %v2053 = vmul.f32 %v1811, %v2038
      %v2054 = vmul.f32 %v1812, %v2038
      %v2055 = vmul.f32 %v1813, %v2038
      %v2056 = vmul.f32 %v1814, %v2038
      %v2057 = vmul.f32 %v1815, %v2038
      %v2058 = vmul.f32 %v1816, %v2038
      %v2059 = vmul.f32 %v1817, %v2038
      %v2060 = vmul.f32 %v1818, %v2038
      %v2061 = vmul.f32 %v1819, %v2038
      %v2062 = vmul.f32 %v1820, %v2038
      %v2063 = vmul.f32 %v1821, %v2038
      %v2064 = vmul.f32 %v1822, %v2038
      %v2065 = vmul.f32 %v1823, %v2038
      %v2066 = vmul.f32 %v1824, %v2038
      %v2067 = vmul.f32 %v1825, %v2038
      %v2068 = vmul.f32 %v1826, %v2038
      %v2069 = vmul.f32 %v1827, %v2038
      %v2070 = vmul.f32 %v1828, %v2038
      %v2071 = vadd.f32 %v2003, %v2039
      %v2072 = vadd.f32 %v2004, %v2040
      %v2073 = vadd.f32 %v2005, %v2041
      %v2074 = vadd.f32 %v2006, %v2042
      %v2075 = vadd.f32 %v2007, %v2043
      %v2076 = vadd.f32 %v2008, %v2044
      %v2077 = vadd.f32 %v2009, %v2045
      %v2078 = vadd.f32 %v2010, %v2046
      %v2079 = vadd.f32 %v2011, %v2047
      %v2080 = vadd.f32 %v2012, %v2048
      %v2081 = vadd.f32 %v2013, %v2049
      %v2082 = vadd.f32 %v2014, %v2050
      %v2083 = vadd.f32 %v2015, %v2051
      %v2084 = vadd.f32 %v2016, %v2052
      %v2085 = vadd.f32 %v2017, %v2053
      %v2086 = vadd.f32 %v2018, %v2054
      %v2087 = vadd.f32 %v2019, %v2055
      %v2088 = vadd.f32 %v2020, %v2056
      %v2089 = vadd.f32 %v2021, %v2057
      %v2090 = vadd.f32 %v2022, %v2058
      %v2091 = vadd.f32 %v2023, %v2059
      %v2092 = vadd.f32 %v2024, %v2060
      %v2093 = vadd.f32 %v2025, %v2061
      %v2094 = vadd.f32 %v2026, %v2062
      %v2095 = vadd.f32 %v2027, %v2063
      %v2096 = vadd.f32 %v2028, %v2064
      %v2097 = vadd.f32 %v2029, %v2065
      %v2098 = vadd.f32 %v2030, %v2066
      %v2099 = vadd.f32 %v2031, %v2067
      %v2100 = vadd.f32 %v2032, %v2068
      %v2101 = vadd.f32 %v2033, %v2069
      %v2102 = vadd.f32 %v2034, %v2070
      %v2103 = vlaneseq
      %v2104 = vshrl.u32 %v2103, 7
      %v2105 = vsub.s32 0, %v2104
      %v2106 = vrot.slane %v268, %v2105
      %v2107 = vmul.f32 %v1799, %v2106
      %v2108 = vmul.f32 %v1800, %v2106
      %v2109 = vmul.f32 %v1801, %v2106
      %v2110 = vmul.f32 %v1802, %v2106
      %v2111 = vmul.f32 %v1803, %v2106
      %v2112 = vmul.f32 %v1804, %v2106
      %v2113 = vmul.f32 %v1805, %v2106
      %v2114 = vmul.f32 %v1806, %v2106
      %v2115 = vmul.f32 %v1807, %v2106
      %v2116 = vmul.f32 %v1808, %v2106
      %v2117 = vmul.f32 %v1809, %v2106
      %v2118 = vmul.f32 %v1810, %v2106
      %v2119 = vmul.f32 %v1811, %v2106
      %v2120 = vmul.f32 %v1812, %v2106
      %v2121 = vmul.f32 %v1813, %v2106
      %v2122 = vmul.f32 %v1814, %v2106
      %v2123 = vmul.f32 %v1815, %v2106
      %v2124 = vmul.f32 %v1816, %v2106
      %v2125 = vmul.f32 %v1817, %v2106
      %v2126 = vmul.f32 %v1818, %v2106
      %v2127 = vmul.f32 %v1819, %v2106
      %v2128 = vmul.f32 %v1820, %v2106
      %v2129 = vmul.f32 %v1821, %v2106
      %v2130 = vmul.f32 %v1822, %v2106
      %v2131 = vmul.f32 %v1823, %v2106
      %v2132 = vmul.f32 %v1824, %v2106
      %v2133 = vmul.f32 %v1825, %v2106
      %v2134 = vmul.f32 %v1826, %v2106
      %v2135 = vmul.f32 %v1827, %v2106
      %v2136 = vmul.f32 %v1828, %v2106
      %v2137 = vmul.f32 %v1829, %v2106
      %v2138 = vmul.f32 %v1830, %v2106
      %v2139 = vadd.f32 %v2071, %v2107
      %v2140 = vadd.f32 %v2072, %v2108
      %v2141 = vadd.f32 %v2073, %v2109
      %v2142 = vadd.f32 %v2074, %v2110
      %v2143 = vadd.f32 %v2075, %v2111
      %v2144 = vadd.f32 %v2076, %v2112
      %v2145 = vadd.f32 %v2077, %v2113
      %v2146 = vadd.f32 %v2078, %v2114
      %v2147 = vadd.f32 %v2079, %v2115
      %v2148 = vadd.f32 %v2080, %v2116
      %v2149 = vadd.f32 %v2081, %v2117
      %v2150 = vadd.f32 %v2082, %v2118
      %v2151 = vadd.f32 %v2083, %v2119
      %v2152 = vadd.f32 %v2084, %v2120
      %v2153 = vadd.f32 %v2085, %v2121
      %v2154 = vadd.f32 %v2086, %v2122
      %v2155 = vadd.f32 %v2087, %v2123
      %v2156 = vadd.f32 %v2088, %v2124
      %v2157 = vadd.f32 %v2089, %v2125
      %v2158 = vadd.f32 %v2090, %v2126
      %v2159 = vadd.f32 %v2091, %v2127
      %v2160 = vadd.f32 %v2092, %v2128
      %v2161 = vadd.f32 %v2093, %v2129
      %v2162 = vadd.f32 %v2094, %v2130
      %v2163 = vadd.f32 %v2095, %v2131
      %v2164 = vadd.f32 %v2096, %v2132
      %v2165 = vadd.f32 %v2097, %v2133
      %v2166 = vadd.f32 %v2098, %v2134
      %v2167 = vadd.f32 %v2099, %v2135
      %v2168 = vadd.f32 %v2100, %v2136
      %v2169 = vadd.f32 %v2101, %v2137
      %v2170 = vadd.f32 %v2102, %v2138
      %v2171 = vpack.c.bf16 %v2140, %v2139
      %v2172 = vpack.c.bf16 %v2142, %v2141
      %v2173 = vpack.c.bf16 %v2144, %v2143
      %v2174 = vpack.c.bf16 %v2146, %v2145
      %v2175 = vpack.c.bf16 %v2148, %v2147
      %v2176 = vpack.c.bf16 %v2150, %v2149
      %v2177 = vpack.c.bf16 %v2152, %v2151
      %v2178 = vpack.c.bf16 %v2154, %v2153
      %v2179 = vpack.c.bf16 %v2156, %v2155
      %v2180 = vpack.c.bf16 %v2158, %v2157
      %v2181 = vpack.c.bf16 %v2160, %v2159
      %v2182 = vpack.c.bf16 %v2162, %v2161
      %v2183 = vpack.c.bf16 %v2164, %v2163
      %v2184 = vpack.c.bf16 %v2166, %v2165
      %v2185 = vpack.c.bf16 %v2168, %v2167
      %v2186 = vpack.c.bf16 %v2170, %v2169
      %v2203 = vunpack.c.l.b16 %v2171
      %v2204 = vunpack.c.h.b16 %v2171
      %v2205 = vunpack.c.l.b16 %v2172
      %v2206 = vunpack.c.h.b16 %v2172
      %v2207 = vunpack.c.l.b16 %v2173
      %v2208 = vunpack.c.h.b16 %v2173
      %v2209 = vunpack.c.l.b16 %v2174
      %v2210 = vunpack.c.h.b16 %v2174
      %v2211 = vunpack.c.l.b16 %v2175
      %v2212 = vunpack.c.h.b16 %v2175
      %v2213 = vunpack.c.l.b16 %v2176
      %v2214 = vunpack.c.h.b16 %v2176
      %v2215 = vunpack.c.l.b16 %v2177
      %v2216 = vunpack.c.h.b16 %v2177
      %v2217 = vunpack.c.l.b16 %v2178
      %v2218 = vunpack.c.h.b16 %v2178
      %v2219 = vunpack.c.l.b16 %v2179
      %v2220 = vunpack.c.h.b16 %v2179
      %v2221 = vunpack.c.l.b16 %v2180
      %v2222 = vunpack.c.h.b16 %v2180
      %v2223 = vunpack.c.l.b16 %v2181
      %v2224 = vunpack.c.h.b16 %v2181
      %v2225 = vunpack.c.l.b16 %v2182
      %v2226 = vunpack.c.h.b16 %v2182
      %v2227 = vunpack.c.l.b16 %v2183
      %v2228 = vunpack.c.h.b16 %v2183
      %v2229 = vunpack.c.l.b16 %v2184
      %v2230 = vunpack.c.h.b16 %v2184
      %v2231 = vunpack.c.l.b16 %v2185
      %v2232 = vunpack.c.h.b16 %v2185
      %v2233 = vunpack.c.l.b16 %v2186
      %v2234 = vunpack.c.h.b16 %v2186
      %v2235 = vpack.c.b16 %v2203, %v2203
      %v2236 = vpack.c.b16 %v2204, %v2204
      %v2237 = vpack.c.b16 %v2205, %v2205
      %v2238 = vpack.c.b16 %v2206, %v2206
      %v2239 = vpack.c.b16 %v2207, %v2207
      %v2240 = vpack.c.b16 %v2208, %v2208
      %v2241 = vpack.c.b16 %v2209, %v2209
      %v2242 = vpack.c.b16 %v2210, %v2210
      %v2243 = vpack.c.b16 %v2211, %v2211
      %v2244 = vpack.c.b16 %v2212, %v2212
      %v2245 = vpack.c.b16 %v2213, %v2213
      %v2246 = vpack.c.b16 %v2214, %v2214
      %v2247 = vpack.c.b16 %v2215, %v2215
      %v2248 = vpack.c.b16 %v2216, %v2216
      %v2249 = vpack.c.b16 %v2217, %v2217
      %v2250 = vpack.c.b16 %v2218, %v2218
      %v2251 = vpack.c.b16 %v2219, %v2219
      %v2252 = vpack.c.b16 %v2220, %v2220
      %v2253 = vpack.c.b16 %v2221, %v2221
      %v2254 = vpack.c.b16 %v2222, %v2222
      %v2255 = vpack.c.b16 %v2223, %v2223
      %v2256 = vpack.c.b16 %v2224, %v2224
      %v2257 = vpack.c.b16 %v2225, %v2225
      %v2258 = vpack.c.b16 %v2226, %v2226
      %v2259 = vpack.c.b16 %v2227, %v2227
      %v2260 = vpack.c.b16 %v2228, %v2228
      %v2261 = vpack.c.b16 %v2229, %v2229
      %v2262 = vpack.c.b16 %v2230, %v2230
      %v2263 = vpack.c.b16 %v2231, %v2231
      %v2264 = vpack.c.b16 %v2232, %v2232
      %v2265 = vpack.c.b16 %v2233, %v2233
      %v2266 = vpack.c.b16 %v2234, %v2234
      %s2299 = smul.u32 0, 2
      %s2300 = smul.addr %s2299, 4
      %s2301 = scalar_lea.vmem %s143, %s2300
      %2302 = vst.msk [vmem:[%s2301] sm:$0xf] %vm147, %v2235
      %2303 = vst.msk [vmem:[%s2301 + $0x4] sm:$0xf] %vm147, %v2236
      %2304 = vst.msk [vmem:[%s2301 + $0x8] sm:$0xf] %vm147, %v2237
      %2305 = vst.msk [vmem:[%s2301 + $0xc] sm:$0xf] %vm147, %v2238
      %2306 = vst.msk [vmem:[%s2301 + $0x10] sm:$0xf] %vm147, %v2239
      %2307 = vst.msk [vmem:[%s2301 + $0x14] sm:$0xf] %vm147, %v2240
      %2308 = vst.msk [vmem:[%s2301 + $0x18] sm:$0xf] %vm147, %v2241
      %2309 = vst.msk [vmem:[%s2301 + $0x1c] sm:$0xf] %vm147, %v2242
      %2310 = vst.msk [vmem:[%s2301 + $0x20] sm:$0xf] %vm147, %v2243
      %2311 = vst.msk [vmem:[%s2301 + $0x24] sm:$0xf] %vm147, %v2244
      %2312 = vst.msk [vmem:[%s2301 + $0x28] sm:$0xf] %vm147, %v2245
      %2313 = vst.msk [vmem:[%s2301 + $0x2c] sm:$0xf] %vm147, %v2246
      %2314 = vst.msk [vmem:[%s2301 + $0x30] sm:$0xf] %vm147, %v2247
      %2315 = vst.msk [vmem:[%s2301 + $0x34] sm:$0xf] %vm147, %v2248
      %2316 = vst.msk [vmem:[%s2301 + $0x38] sm:$0xf] %vm147, %v2249
      %2317 = vst.msk [vmem:[%s2301 + $0x3c] sm:$0xf] %vm147, %v2250
      %2318 = vst.msk [vmem:[%s2301 + $0x40] sm:$0xf] %vm147, %v2251
      %2319 = vst.msk [vmem:[%s2301 + $0x44] sm:$0xf] %vm147, %v2252
      %2320 = vst.msk [vmem:[%s2301 + $0x48] sm:$0xf] %vm147, %v2253
      %2321 = vst.msk [vmem:[%s2301 + $0x4c] sm:$0xf] %vm147, %v2254
      %2322 = vst.msk [vmem:[%s2301 + $0x50] sm:$0xf] %vm147, %v2255
      %2323 = vst.msk [vmem:[%s2301 + $0x54] sm:$0xf] %vm147, %v2256
      %2324 = vst.msk [vmem:[%s2301 + $0x58] sm:$0xf] %vm147, %v2257
      %2325 = vst.msk [vmem:[%s2301 + $0x5c] sm:$0xf] %vm147, %v2258
      %2326 = vst.msk [vmem:[%s2301 + $0x60] sm:$0xf] %vm147, %v2259
      %2327 = vst.msk [vmem:[%s2301 + $0x64] sm:$0xf] %vm147, %v2260
      %2328 = vst.msk [vmem:[%s2301 + $0x68] sm:$0xf] %vm147, %v2261
      %2329 = vst.msk [vmem:[%s2301 + $0x6c] sm:$0xf] %vm147, %v2262
      %2330 = vst.msk [vmem:[%s2301 + $0x70] sm:$0xf] %vm147, %v2263
      %2331 = vst.msk [vmem:[%s2301 + $0x74] sm:$0xf] %vm147, %v2264
      %2332 = vst.msk [vmem:[%s2301 + $0x78] sm:$0xf] %vm147, %v2265
      %2333 = vst.msk [vmem:[%s2301 + $0x7c] sm:$0xf] %vm147, %v2266
      %p2334 = scmp.lt.s32.totalorder %s13, 1
      %s2335 = scalar_select %p2334, %s13, 1
      %s2336 = smul.addr %s2335, 32
      %s2337 = smul.addr %s2336, 4
      %s2338 = scalar_lea.vmem %s2, %s2337
      // Predicated region
      $region29: #{tpu_custom_call.1} parent=27 // pred_check
        %p2339 = pneg %p78
      $region30: #{tpu_custom_call.1} parent=27 // pred_check_branch
        %2341 = sbr.rel (%p2339) target = $region32
      $region31: #{tpu_custom_call.1} parent=27 // pred_region
        _
      $region32: #{tpu_custom_call.1} parent=27 // pred_fallthru
        _
    $region28: #{tpu_custom_call.1} parent=5 // pred_fallthru
      _
    %p2342 = scmp.le.s32.totalorder 2, %s8
    // Predicated region
    $region33: #{tpu_custom_call.1} parent=5 // pred_check
      %p2343 = pneg %p2342
    $region34: #{tpu_custom_call.1} parent=5 // pred_check_branch
      %2345 = sbr.rel (%p2343) target = $region36
    $region35: #{tpu_custom_call.1} parent=5 // pred_region
      %s2346 = ssub.s32 %s8, 2
      // Predicated region
      $region37: #{tpu_custom_call.1} parent=35 // pred_check
        %p2347 = pneg %p84
      $region38: #{tpu_custom_call.1} parent=35 // pred_check_branch
        %2349 = sbr.rel (%p2347) target = $region40
      $region39: #{tpu_custom_call.1} parent=35 // pred_region
        %p2350 = scmp.lt.s32.totalorder %s14, 1
        %s2351 = scalar_select %p2350, %s14, 1
        %s2352 = smul.addr %s2351, 32
        %s2353 = smul.addr %s2352, 4
        %s2354 = scalar_lea.vmem %s2, %s2353
      $region40: #{tpu_custom_call.1} parent=35 // pred_fallthru
        _
    $region36: #{tpu_custom_call.1} parent=5 // pred_fallthru
      _
  $region6: #{tpu_custom_call.1} parent=0 // loop_footer
    %s12 = sadd.s32 1, %s8
  $region7: #{tpu_custom_call.1} parent=0 // loop_footer_branch
    %7 = sbr.rel target = $region3
  $region8: #{tpu_custom_call.1} parent=0 // loop_exit
    _

</llo_original>
